<compile_context>
chip_gen: v6e
topology: v6e:2x2x1
jax: 0.10.0
libtpu: 0.0.40
codegen_flags: <defaults>
</compile_context>

<pallas_src>
import jax
import jax.numpy as jnp
from jax.experimental import pallas as pl
from jax.experimental.pallas import tpu as pltpu

# ---------------- configuration (small, consistent with the module) ----------------
B = 2          # batch
NX = 8         # query sequence length
NY = 8         # key/value sequence length
C = 32         # embedding dim
NUM_HEADS = 4  # heads
HEAD_DIM = C // NUM_HEADS
MLP_RATIO = 4.0
HIDDEN = int(C * MLP_RATIO)
SCALE = HEAD_DIM ** (-0.5)
EPS = 1e-5

ROWS_X = B * NX   # 16 query rows after batch folding
ROWS_Y = B * NY   # 16 key/value rows after batch folding

# ---------------- packed weight-slab layout (built once, outside the call path) -----
# Slab A: (48, 256) f32
#   rows [0, 32)  : [ Wq(32) | Wkv(64) | Wproj(32) | fc1_w(128) ] along lanes
#   rows [32, 41) : one bias / LayerNorm vector per row (zero-padded to 256 lanes)
# Slab B: fc2_w (128, 32) f32
SLAB_A_LANES = 4 * C + HIDDEN          # 256
SLAB_A_ROWS = 48                       # 41 used rows, padded up to a multiple of 8
COL_WQ = 0                             # lanes [0, 32)
COL_WKV = C                            # lanes [32, 96)
COL_WPROJ = 3 * C                      # lanes [96, 128)
COL_FC1 = 4 * C                        # lanes [128, 256)
(R_LN1W, R_LN1B, R_QB, R_KVB, R_PROJB,
 R_LN2W, R_LN2B, R_FC1B, R_FC2B) = range(C, C + 9)


# ---------------- in-kernel helpers ----------------
def _layernorm(t, w, b):
    # t: (R, C); w, b: (1, C)
    mu = jnp.mean(t, axis=-1, keepdims=True)
    var = jnp.mean((t - mu) ** 2, axis=-1, keepdims=True)
    return (t - mu) * jax.lax.rsqrt(var + EPS) * w + b


def _softmax_last(a):
    m = jnp.max(a, axis=-1, keepdims=True)
    e = jnp.exp(a - m)
    return e / jnp.sum(e, axis=-1, keepdims=True)


def _erf_poly(x):
    # Abramowitz & Stegun 7.1.26, max abs error ~1.5e-7: keeps exact-erf GELU parity
    # using only mul/add/exp/where (guaranteed Mosaic lowering).
    p = 0.3275911
    a1, a2, a3, a4, a5 = 0.254829592, -0.284496736, 1.421413741, -1.453152027, 1.061405429
    ax = jnp.abs(x)
    t = 1.0 / (1.0 + p * ax)
    poly = ((((a5 * t + a4) * t + a3) * t + a2) * t + a1) * t
    y = 1.0 - poly * jnp.exp(-ax * ax)
    return jnp.where(x < 0.0, -y, y)


def _gelu_exact(x):
    return 0.5 * x * (1.0 + _erf_poly(x * 0.7071067811865476))


# ---------------- the kernel ----------------
def cross_block_kernel(x_ref, y_ref, wa_ref, wb_ref, o_ref):
    x2d = x_ref[...].reshape(ROWS_X, C)           # leading-dim merge only
    y2d = y_ref[...].reshape(ROWS_Y, C)

    # ----- norm1 on x and y in one fused 32-row pass (shared weights) -----
    ln1_w = wa_ref[R_LN1W:R_LN1W + 1, 0:C]
    ln1_b = wa_ref[R_LN1B:R_LN1B + 1, 0:C]
    xyn = _layernorm(jnp.concatenate([x2d, y2d], axis=0), ln1_w, ln1_b)   # (32, C)
    xn = xyn[:ROWS_X]
    yn = xyn[ROWS_X:]

    # ----- full-width projections: 2 matmuls instead of 12 per-head ones -----
    wq = wa_ref[0:C, COL_WQ:COL_WQ + C]                 # (C, C), scale pre-folded
    wkv = wa_ref[0:C, COL_WKV:COL_WKV + 2 * C]          # (C, 2C)
    qb = wa_ref[R_QB:R_QB + 1, 0:C]                     # (1, C), scale pre-folded
    kvb = wa_ref[R_KVB:R_KVB + 1, 0:2 * C]              # (1, 2C)
    q = jnp.dot(xn, wq, preferred_element_type=jnp.float32) + qb     # (16, C)
    kv = jnp.dot(yn, wkv, preferred_element_type=jnp.float32) + kvb  # (16, 2C)

    # ----- head-batched attention: fold (head, batch) into one leading batch dim -----
    def split_heads(t, col0, n):
        # t: (B*n, *) with rows ordered (b, n); returns (H*B, n, D) with z = h*B + b
        parts = [
            t[:, col0 + h * HEAD_DIM: col0 + (h + 1) * HEAD_DIM].reshape(B, n, HEAD_DIM)
            for h in range(NUM_HEADS)
        ]
        return jnp.concatenate(parts, axis=0)

    qh = split_heads(q, 0, NX)        # (H*B, NX, D) = (8, 8, 8)
    kh = split_heads(kv, 0, NY)       # k = first C lanes of kv
    vh = split_heads(kv, C, NY)       # v = last  C lanes of kv

    att = jnp.einsum("zqd,zkd->zqk", qh, kh,
                     preferred_element_type=jnp.float32)              # (8, NX, NY)
    att = _softmax_last(att)          # single fused softmax over all (head, batch)
    o = jnp.einsum("zqk,zkd->zqd", att, vh,
                   preferred_element_type=jnp.float32)                # (8, NX, D)

    # ----- head concat folded back to (16, C) + ONE output-projection matmul -----
    o_cat = jnp.concatenate(
        [o[h * B:(h + 1) * B].reshape(ROWS_X, HEAD_DIM) for h in range(NUM_HEADS)],
        axis=1)                                                       # (16, C)
    wproj = wa_ref[0:C, COL_WPROJ:COL_WPROJ + C]
    proj_b = wa_ref[R_PROJB:R_PROJB + 1, 0:C]
    # ls1 = Identity (init_values=None), drop_path / dropouts = Identity
    x1 = x2d + jnp.dot(o_cat, wproj, preferred_element_type=jnp.float32) + proj_b

    # ----- norm2 + MLP -----
    ln2_w = wa_ref[R_LN2W:R_LN2W + 1, 0:C]
    ln2_b = wa_ref[R_LN2B:R_LN2B + 1, 0:C]
    x2 = _layernorm(x1, ln2_w, ln2_b)

    fc1_w = wa_ref[0:C, COL_FC1:COL_FC1 + HIDDEN]                     # (C, HIDDEN)
    fc1_b = wa_ref[R_FC1B:R_FC1B + 1, 0:HIDDEN]
    h1 = jnp.dot(x2, fc1_w, preferred_element_type=jnp.float32) + fc1_b
    h1 = _gelu_exact(h1)              # nn.GELU default: exact erf form
    fc2_b = wa_ref[R_FC2B:R_FC2B + 1, 0:C]
    h2 = jnp.dot(h1, wb_ref[...], preferred_element_type=jnp.float32) + fc2_b

    o_ref[...] = (x1 + h2).reshape(B, NX, C).astype(o_ref.dtype)


# ---------------- wrapper ----------------
def _full_spec(shape):
    nd = len(shape)
    return pl.BlockSpec(shape, lambda i: (0,) * nd)


@jax.jit
def cross_block(x, y, slab_a, slab_b):
    """x: (B, NX, C), y: (B, NY, C); slab_a/slab_b: pre-packed weights (see pack_weights)."""
    return pl.pallas_call(
        cross_block_kernel,
        out_shape=jax.ShapeDtypeStruct((B, NX, C), jnp.float32),
        grid_spec=pltpu.PrefetchScalarGridSpec(
            num_scalar_prefetch=0,
            grid=(1,),                              # single step; whole problem fits VMEM
            in_specs=[_full_spec(x.shape), _full_spec(y.shape),
                      _full_spec(slab_a.shape), _full_spec(slab_b.shape)],
            out_specs=_full_spec((B, NX, C)),
        ),
        compiler_params=pltpu.CompilerParams(
            dimension_semantics=("arbitrary",),
        ),
    )(x, y, slab_a, slab_b)


def pack_weights(p):
    """One-time, wrapper-side weight packing (hoisted out of the per-call path):
    fold SCALE into q, concat all 32-row matrices + all bias/LN vectors into slab A,
    keep fc2_w as slab B."""
    wq = p["q_w"] * SCALE
    qb = p["q_b"] * SCALE
    mats = jnp.concatenate([wq, p["kv_w"], p["proj_w"], p["fc1_w"]], axis=1)   # (32, 256)

    def row(v):
        return jnp.pad(v, ((0, 0), (0, SLAB_A_LANES - v.shape[1])))
    vecs = jnp.concatenate([
        row(p["ln1_w"]), row(p["ln1_b"]),
        row(qb), row(p["kv_b"]), row(p["proj_b"]),
        row(p["ln2_w"]), row(p["ln2_b"]),
        row(p["fc1_b"]), row(p["fc2_b"]),
    ], axis=0)                                                                  # (9, 256)
    slab_a = jnp.concatenate([mats, vecs], axis=0)                              # (41, 256)
    slab_a = jnp.pad(slab_a, ((0, SLAB_A_ROWS - slab_a.shape[0]), (0, 0)))      # (48, 256)
    slab_b = p["fc2_w"]                                                          # (128, 32)
    return slab_a, slab_b


def _init_params(key):
    """Deterministic synthetic parameters. Linear weights stored as (in, out)."""
    ks = jax.random.split(key, 14)
    s = 0.02
    return {
        # norm1
        "ln1_w": 1.0 + 0.1 * jax.random.normal(ks[0], (1, C), jnp.float32),
        "ln1_b": 0.1 * jax.random.normal(ks[1], (1, C), jnp.float32),
        # attention
        "q_w": s * jax.random.normal(ks[2], (C, C), jnp.float32),
        "q_b": 0.1 * jax.random.normal(ks[3], (1, C), jnp.float32),
        "kv_w": s * jax.random.normal(ks[4], (C, 2 * C), jnp.float32),
        "kv_b": 0.1 * jax.random.normal(ks[5], (1, 2 * C), jnp.float32),
        "proj_w": s * jax.random.normal(ks[6], (C, C), jnp.float32),
        "proj_b": 0.1 * jax.random.normal(ks[7], (1, C), jnp.float32),
        # norm2
        "ln2_w": 1.0 + 0.1 * jax.random.normal(ks[8], (1, C), jnp.float32),
        "ln2_b": 0.1 * jax.random.normal(ks[9], (1, C), jnp.float32),
        # mlp
        "fc1_w": s * jax.random.normal(ks[10], (C, HIDDEN), jnp.float32),
        "fc1_b": 0.1 * jax.random.normal(ks[11], (1, HIDDEN), jnp.float32),
        "fc2_w": s * jax.random.normal(ks[12], (HIDDEN, C), jnp.float32),
        "fc2_b": 0.1 * jax.random.normal(ks[13], (1, C), jnp.float32),
    }


def _reference(x, y, p):
    """Pure-JAX reference of the same forward pass (sanity check)."""
    def ln(t, w, b):
        mu = jnp.mean(t, -1, keepdims=True)
        var = jnp.mean((t - mu) ** 2, -1, keepdims=True)
        return (t - mu) / jnp.sqrt(var + EPS) * w[0] + b[0]

    xn = ln(x, p["ln1_w"], p["ln1_b"])
    yn = ln(y, p["ln1_w"], p["ln1_b"])
    q = xn @ p["q_w"] + p["q_b"][0]
    kv = yn @ p["kv_w"] + p["kv_b"][0]
    k, v = kv[..., :C], kv[..., C:]
    qh = q.reshape(B, NX, NUM_HEADS, HEAD_DIM).transpose(0, 2, 1, 3) * SCALE
    kh = k.reshape(B, NY, NUM_HEADS, HEAD_DIM).transpose(0, 2, 1, 3)
    vh = v.reshape(B, NY, NUM_HEADS, HEAD_DIM).transpose(0, 2, 1, 3)
    att = jax.nn.softmax(jnp.einsum("bhqd,bhkd->bhqk", qh, kh), axis=-1)
    o = jnp.einsum("bhqk,bhkd->bhqd", att, vh).transpose(0, 2, 1, 3).reshape(B, NX, C)
    o = o @ p["proj_w"] + p["proj_b"][0]
    x1 = x + o
    x2 = ln(x1, p["ln2_w"], p["ln2_b"])
    h1 = jax.nn.gelu(x2 @ p["fc1_w"] + p["fc1_b"][0], approximate=False)
    h2 = h1 @ p["fc2_w"] + p["fc2_b"][0]
    return x1 + h2


if __name__ == "__main__":
    key = jax.random.PRNGKey(0)
    kx, ky, kp = jax.random.split(key, 3)
    x = jax.random.normal(kx, (B, NX, C), jnp.float32)
    y = jax.random.normal(ky, (B, NY, C), jnp.float32)
    params = _init_params(kp)

    # Weight packing happens ONCE, outside the steady-state call path.
    slab_a, slab_b = jax.block_until_ready(pack_weights(params))

    out = jax.block_until_ready(cross_block(x, y, slab_a, slab_b))
    ref = _reference(x, y, params)

    assert out.shape == (B, NX, C)
    max_err = float(jnp.max(jnp.abs(out - ref)))
    assert jnp.allclose(out, ref, atol=1e-4, rtol=1e-4), max_err
    print("KERNEL_OK")
</pallas_src>

<mosaic_0001>
module attributes {stable_mosaic.version = 11 : i64} {
  func.func @cross_block_kernel(%arg0: i32, %arg1: memref<2x8x32xf32, #tpu.memory_space<vmem>>, %arg2: memref<2x8x32xf32, #tpu.memory_space<vmem>>, %arg3: memref<48x256xf32, #tpu.memory_space<vmem>>, %arg4: memref<128x32xf32, #tpu.memory_space<vmem>>, %arg5: memref<2x8x32xf32, #tpu.memory_space<vmem>>) attributes {dimension_semantics = [#tpu.dimension_semantics<arbitrary>], iteration_bounds = array<i64: 1>, scalar_prefetch = 0 : i64, scratch_operands = 0 : i64, tpu.core_type = #tpu.core_type<tc>, window_params = [{pipeline_mode = #tpu.pipeline_mode<synchronous>, transform_indices = @transform_0, window_bounds = array<i64: 2, 8, 32>}, {pipeline_mode = #tpu.pipeline_mode<synchronous>, transform_indices = @transform_1, window_bounds = array<i64: 2, 8, 32>}, {pipeline_mode = #tpu.pipeline_mode<synchronous>, transform_indices = @transform_2, window_bounds = array<i64: 48, 256>}, {pipeline_mode = #tpu.pipeline_mode<synchronous>, transform_indices = @transform_3, window_bounds = array<i64: 128, 32>}, {pipeline_mode = #tpu.pipeline_mode<synchronous>, transform_indices = @transform_4, window_bounds = array<i64: 2, 8, 32>}]} {
    %c0 = arith.constant 0 : index
    %c0_0 = arith.constant 0 : index
    %c0_1 = arith.constant 0 : index
    %0 = vector.load %arg1[%c0, %c0_0, %c0_1] : memref<2x8x32xf32, #tpu.memory_space<vmem>>, vector<2x8x32xf32>
    %1 = vector.shape_cast %0 : vector<2x8x32xf32> to vector<16x32xf32>
    %c0_2 = arith.constant 0 : index
    %c0_3 = arith.constant 0 : index
    %c0_4 = arith.constant 0 : index
    %2 = vector.load %arg2[%c0_2, %c0_3, %c0_4] : memref<2x8x32xf32, #tpu.memory_space<vmem>>, vector<2x8x32xf32>
    %3 = vector.shape_cast %2 : vector<2x8x32xf32> to vector<16x32xf32>
    %c32 = arith.constant 32 : index
    %c0_5 = arith.constant 0 : index
    %4 = vector.load %arg3[%c32, %c0_5] : memref<48x256xf32, #tpu.memory_space<vmem>>, vector<1x32xf32>
    %c33 = arith.constant 33 : index
    %c0_6 = arith.constant 0 : index
    %5 = vector.load %arg3[%c33, %c0_6] : memref<48x256xf32, #tpu.memory_space<vmem>>, vector<1x32xf32>
    %6 = tpu.concatenate %1, %3 in 0 : vector<16x32xf32>, vector<16x32xf32> -> vector<32x32xf32>
    %cst = arith.constant dense<0.000000e+00> : vector<32xf32>
    %7 = vector.multi_reduction <add>, %6, %cst [1] : vector<32x32xf32> to vector<32xf32>
    %8 = vector.shape_cast %7 : vector<32xf32> to vector<32x1xf32>
    %cst_7 = arith.constant 3.200000e+01 : f32
    %9 = vector.broadcast %cst_7 : f32 to vector<32x1xf32>
    %10 = arith.divf %8, %9 : vector<32x1xf32>
    %11 = vector.broadcast %10 : vector<32x1xf32> to vector<32x32xf32>
    %12 = arith.subf %6, %11 : vector<32x32xf32>
    %13 = arith.mulf %12, %12 : vector<32x32xf32>
    %cst_8 = arith.constant dense<0.000000e+00> : vector<32xf32>
    %14 = vector.multi_reduction <add>, %13, %cst_8 [1] : vector<32x32xf32> to vector<32xf32>
    %15 = vector.shape_cast %14 : vector<32xf32> to vector<32x1xf32>
    %cst_9 = arith.constant 3.200000e+01 : f32
    %16 = vector.broadcast %cst_9 : f32 to vector<32x1xf32>
    %17 = arith.divf %15, %16 : vector<32x1xf32>
    %18 = vector.broadcast %10 : vector<32x1xf32> to vector<32x32xf32>
    %19 = arith.subf %6, %18 : vector<32x32xf32>
    %cst_10 = arith.constant 9.99999974E-6 : f32
    %20 = vector.broadcast %cst_10 : f32 to vector<32x1xf32>
    %21 = arith.addf %17, %20 : vector<32x1xf32>
    %22 = math.rsqrt %21 : vector<32x1xf32>
    %23 = vector.broadcast %22 : vector<32x1xf32> to vector<32x32xf32>
    %24 = arith.mulf %19, %23 : vector<32x32xf32>
    %25 = vector.broadcast %4 : vector<1x32xf32> to vector<32x32xf32>
    %26 = arith.mulf %24, %25 : vector<32x32xf32>
    %27 = vector.broadcast %5 : vector<1x32xf32> to vector<32x32xf32>
    %28 = arith.addf %26, %27 : vector<32x32xf32>
    %29 = vector.extract_strided_slice %28 {offsets = [0, 0], sizes = [16, 32], strides = [1, 1]} : vector<32x32xf32> to vector<16x32xf32>
    %30 = vector.extract_strided_slice %28 {offsets = [16, 0], sizes = [16, 32], strides = [1, 1]} : vector<32x32xf32> to vector<16x32xf32>
    %c0_11 = arith.constant 0 : index
    %c0_12 = arith.constant 0 : index
    %31 = vector.load %arg3[%c0_11, %c0_12] : memref<48x256xf32, #tpu.memory_space<vmem>>, vector<32x32xf32>
    %c0_13 = arith.constant 0 : index
    %c32_14 = arith.constant 32 : index
    %32 = vector.load %arg3[%c0_13, %c32_14] : memref<48x256xf32, #tpu.memory_space<vmem>>, vector<32x64xf32>
    %c34 = arith.constant 34 : index
    %c0_15 = arith.constant 0 : index
    %33 = vector.load %arg3[%c34, %c0_15] : memref<48x256xf32, #tpu.memory_space<vmem>>, vector<1x32xf32>
    %c35 = arith.constant 35 : index
    %c0_16 = arith.constant 0 : index
    %34 = vector.load %arg3[%c35, %c0_16] : memref<48x256xf32, #tpu.memory_space<vmem>>, vector<1x64xf32>
    %cst_17 = arith.constant dense<0.000000e+00> : vector<16x32xf32>
    %35 = tpu.matmul %29, %31, %cst_17 {dimension_numbers = #tpu.dot_dimension_numbers<[1], [0], [0], [1], [0, 0, 1, 1], [], []>} : vector<16x32xf32>, vector<32x32xf32>, vector<16x32xf32> -> vector<16x32xf32>
    %36 = vector.broadcast %33 : vector<1x32xf32> to vector<16x32xf32>
    %37 = arith.addf %35, %36 : vector<16x32xf32>
    %cst_18 = arith.constant dense<0.000000e+00> : vector<16x64xf32>
    %38 = tpu.matmul %30, %32, %cst_18 {dimension_numbers = #tpu.dot_dimension_numbers<[1], [0], [0], [1], [0, 0, 1, 1], [], []>} : vector<16x32xf32>, vector<32x64xf32>, vector<16x64xf32> -> vector<16x64xf32>
    %39 = vector.broadcast %34 : vector<1x64xf32> to vector<16x64xf32>
    %40 = arith.addf %38, %39 : vector<16x64xf32>
    %41 = vector.extract_strided_slice %37 {offsets = [0, 0], sizes = [16, 8], strides = [1, 1]} : vector<16x32xf32> to vector<16x8xf32>
    %42 = vector.shape_cast %41 : vector<16x8xf32> to vector<2x8x8xf32>
    %43 = vector.extract_strided_slice %37 {offsets = [0, 8], sizes = [16, 8], strides = [1, 1]} : vector<16x32xf32> to vector<16x8xf32>
    %44 = vector.shape_cast %43 : vector<16x8xf32> to vector<2x8x8xf32>
    %45 = vector.extract_strided_slice %37 {offsets = [0, 16], sizes = [16, 8], strides = [1, 1]} : vector<16x32xf32> to vector<16x8xf32>
    %46 = vector.shape_cast %45 : vector<16x8xf32> to vector<2x8x8xf32>
    %47 = vector.extract_strided_slice %37 {offsets = [0, 24], sizes = [16, 8], strides = [1, 1]} : vector<16x32xf32> to vector<16x8xf32>
    %48 = vector.shape_cast %47 : vector<16x8xf32> to vector<2x8x8xf32>
    %49 = tpu.concatenate %42, %44, %46, %48 in 0 : vector<2x8x8xf32>, vector<2x8x8xf32>, vector<2x8x8xf32>, vector<2x8x8xf32> -> vector<8x8x8xf32>
    %50 = vector.extract_strided_slice %40 {offsets = [0, 0], sizes = [16, 8], strides = [1, 1]} : vector<16x64xf32> to vector<16x8xf32>
    %51 = vector.shape_cast %50 : vector<16x8xf32> to vector<2x8x8xf32>
    %52 = vector.extract_strided_slice %40 {offsets = [0, 8], sizes = [16, 8], strides = [1, 1]} : vector<16x64xf32> to vector<16x8xf32>
    %53 = vector.shape_cast %52 : vector<16x8xf32> to vector<2x8x8xf32>
    %54 = vector.extract_strided_slice %40 {offsets = [0, 16], sizes = [16, 8], strides = [1, 1]} : vector<16x64xf32> to vector<16x8xf32>
    %55 = vector.shape_cast %54 : vector<16x8xf32> to vector<2x8x8xf32>
    %56 = vector.extract_strided_slice %40 {offsets = [0, 24], sizes = [16, 8], strides = [1, 1]} : vector<16x64xf32> to vector<16x8xf32>
    %57 = vector.shape_cast %56 : vector<16x8xf32> to vector<2x8x8xf32>
    %58 = tpu.concatenate %51, %53, %55, %57 in 0 : vector<2x8x8xf32>, vector<2x8x8xf32>, vector<2x8x8xf32>, vector<2x8x8xf32> -> vector<8x8x8xf32>
    %59 = vector.extract_strided_slice %40 {offsets = [0, 32], sizes = [16, 8], strides = [1, 1]} : vector<16x64xf32> to vector<16x8xf32>
    %60 = vector.shape_cast %59 : vector<16x8xf32> to vector<2x8x8xf32>
    %61 = vector.extract_strided_slice %40 {offsets = [0, 40], sizes = [16, 8], strides = [1, 1]} : vector<16x64xf32> to vector<16x8xf32>
    %62 = vector.shape_cast %61 : vector<16x8xf32> to vector<2x8x8xf32>
    %63 = vector.extract_strided_slice %40 {offsets = [0, 48], sizes = [16, 8], strides = [1, 1]} : vector<16x64xf32> to vector<16x8xf32>
    %64 = vector.shape_cast %63 : vector<16x8xf32> to vector<2x8x8xf32>
    %65 = vector.extract_strided_slice %40 {offsets = [0, 56], sizes = [16, 8], strides = [1, 1]} : vector<16x64xf32> to vector<16x8xf32>
    %66 = vector.shape_cast %65 : vector<16x8xf32> to vector<2x8x8xf32>
    %67 = tpu.concatenate %60, %62, %64, %66 in 0 : vector<2x8x8xf32>, vector<2x8x8xf32>, vector<2x8x8xf32>, vector<2x8x8xf32> -> vector<8x8x8xf32>
    "tpu.trace_start"() <{level = 10 : i32, message = "zqd,zkd->zqk"}> : () -> ()
    %cst_19 = arith.constant dense<0.000000e+00> : vector<8x8x8xf32>
    %68 = tpu.matmul %49, %58, %cst_19 {dimension_numbers = #tpu.dot_dimension_numbers<[2], [2], [1], [1], [0, 0, 0, 1, 1, 1], [0], [0]>} : vector<8x8x8xf32>, vector<8x8x8xf32>, vector<8x8x8xf32> -> vector<8x8x8xf32>
    "tpu.trace_stop"() : () -> ()
    %cst_20 = arith.constant dense<0xFF800000> : vector<8x8xf32>
    %69 = vector.multi_reduction <maximumf>, %68, %cst_20 [2] : vector<8x8x8xf32> to vector<8x8xf32>
    %70 = vector.shape_cast %69 : vector<8x8xf32> to vector<8x8x1xf32>
    %71 = vector.broadcast %70 : vector<8x8x1xf32> to vector<8x8x8xf32>
    %72 = arith.subf %68, %71 : vector<8x8x8xf32>
    %73 = math.exp %72 : vector<8x8x8xf32>
    %cst_21 = arith.constant dense<0.000000e+00> : vector<8x8xf32>
    %74 = vector.multi_reduction <add>, %73, %cst_21 [2] : vector<8x8x8xf32> to vector<8x8xf32>
    %75 = vector.shape_cast %74 : vector<8x8xf32> to vector<8x8x1xf32>
    %76 = vector.broadcast %75 : vector<8x8x1xf32> to vector<8x8x8xf32>
    %77 = arith.divf %73, %76 : vector<8x8x8xf32>
    "tpu.trace_start"() <{level = 10 : i32, message = "zqk,zkd->zqd"}> : () -> ()
    %cst_22 = arith.constant dense<0.000000e+00> : vector<8x8x8xf32>
    %78 = tpu.matmul %77, %67, %cst_22 {dimension_numbers = #tpu.dot_dimension_numbers<[2], [1], [1], [2], [0, 0, 0, 1, 1, 2], [0], [0]>} : vector<8x8x8xf32>, vector<8x8x8xf32>, vector<8x8x8xf32> -> vector<8x8x8xf32>
    "tpu.trace_stop"() : () -> ()
    %79 = vector.extract_strided_slice %78 {offsets = [0, 0, 0], sizes = [2, 8, 8], strides = [1, 1, 1]} : vector<8x8x8xf32> to vector<2x8x8xf32>
    %80 = vector.shape_cast %79 : vector<2x8x8xf32> to vector<16x8xf32>
    %81 = vector.extract_strided_slice %78 {offsets = [2, 0, 0], sizes = [2, 8, 8], strides = [1, 1, 1]} : vector<8x8x8xf32> to vector<2x8x8xf32>
    %82 = vector.shape_cast %81 : vector<2x8x8xf32> to vector<16x8xf32>
    %83 = vector.extract_strided_slice %78 {offsets = [4, 0, 0], sizes = [2, 8, 8], strides = [1, 1, 1]} : vector<8x8x8xf32> to vector<2x8x8xf32>
    %84 = vector.shape_cast %83 : vector<2x8x8xf32> to vector<16x8xf32>
    %85 = vector.extract_strided_slice %78 {offsets = [6, 0, 0], sizes = [2, 8, 8], strides = [1, 1, 1]} : vector<8x8x8xf32> to vector<2x8x8xf32>
    %86 = vector.shape_cast %85 : vector<2x8x8xf32> to vector<16x8xf32>
    %87 = tpu.concatenate %80, %82, %84, %86 in 1 : vector<16x8xf32>, vector<16x8xf32>, vector<16x8xf32>, vector<16x8xf32> -> vector<16x32xf32>
    %c0_23 = arith.constant 0 : index
    %c96 = arith.constant 96 : index
    %88 = vector.load %arg3[%c0_23, %c96] : memref<48x256xf32, #tpu.memory_space<vmem>>, vector<32x32xf32>
    %c36 = arith.constant 36 : index
    %c0_24 = arith.constant 0 : index
    %89 = vector.load %arg3[%c36, %c0_24] : memref<48x256xf32, #tpu.memory_space<vmem>>, vector<1x32xf32>
    %cst_25 = arith.constant dense<0.000000e+00> : vector<16x32xf32>
    %90 = tpu.matmul %87, %88, %cst_25 {dimension_numbers = #tpu.dot_dimension_numbers<[1], [0], [0], [1], [0, 0, 1, 1], [], []>} : vector<16x32xf32>, vector<32x32xf32>, vector<16x32xf32> -> vector<16x32xf32>
    %91 = arith.addf %1, %90 : vector<16x32xf32>
    %92 = vector.broadcast %89 : vector<1x32xf32> to vector<16x32xf32>
    %93 = arith.addf %91, %92 : vector<16x32xf32>
    %c37 = arith.constant 37 : index
    %c0_26 = arith.constant 0 : index
    %94 = vector.load %arg3[%c37, %c0_26] : memref<48x256xf32, #tpu.memory_space<vmem>>, vector<1x32xf32>
    %c38 = arith.constant 38 : index
    %c0_27 = arith.constant 0 : index
    %95 = vector.load %arg3[%c38, %c0_27] : memref<48x256xf32, #tpu.memory_space<vmem>>, vector<1x32xf32>
    %cst_28 = arith.constant dense<0.000000e+00> : vector<16xf32>
    %96 = vector.multi_reduction <add>, %93, %cst_28 [1] : vector<16x32xf32> to vector<16xf32>
    %97 = vector.shape_cast %96 : vector<16xf32> to vector<16x1xf32>
    %cst_29 = arith.constant 3.200000e+01 : f32
    %98 = vector.broadcast %cst_29 : f32 to vector<16x1xf32>
    %99 = arith.divf %97, %98 : vector<16x1xf32>
    %100 = vector.broadcast %99 : vector<16x1xf32> to vector<16x32xf32>
    %101 = arith.subf %93, %100 : vector<16x32xf32>
    %102 = arith.mulf %101, %101 : vector<16x32xf32>
    %cst_30 = arith.constant dense<0.000000e+00> : vector<16xf32>
    %103 = vector.multi_reduction <add>, %102, %cst_30 [1] : vector<16x32xf32> to vector<16xf32>
    %104 = vector.shape_cast %103 : vector<16xf32> to vector<16x1xf32>
    %cst_31 = arith.constant 3.200000e+01 : f32
    %105 = vector.broadcast %cst_31 : f32 to vector<16x1xf32>
    %106 = arith.divf %104, %105 : vector<16x1xf32>
    %107 = vector.broadcast %99 : vector<16x1xf32> to vector<16x32xf32>
    %108 = arith.subf %93, %107 : vector<16x32xf32>
    %cst_32 = arith.constant 9.99999974E-6 : f32
    %109 = vector.broadcast %cst_32 : f32 to vector<16x1xf32>
    %110 = arith.addf %106, %109 : vector<16x1xf32>
    %111 = math.rsqrt %110 : vector<16x1xf32>
    %112 = vector.broadcast %111 : vector<16x1xf32> to vector<16x32xf32>
    %113 = arith.mulf %108, %112 : vector<16x32xf32>
    %114 = vector.broadcast %94 : vector<1x32xf32> to vector<16x32xf32>
    %115 = arith.mulf %113, %114 : vector<16x32xf32>
    %116 = vector.broadcast %95 : vector<1x32xf32> to vector<16x32xf32>
    %117 = arith.addf %115, %116 : vector<16x32xf32>
    %c0_33 = arith.constant 0 : index
    %c128 = arith.constant 128 : index
    %118 = vector.load %arg3[%c0_33, %c128] : memref<48x256xf32, #tpu.memory_space<vmem>>, vector<32x128xf32>
    %c39 = arith.constant 39 : index
    %c0_34 = arith.constant 0 : index
    %119 = vector.load %arg3[%c39, %c0_34] : memref<48x256xf32, #tpu.memory_space<vmem>>, vector<1x128xf32>
    %cst_35 = arith.constant dense<0.000000e+00> : vector<16x128xf32>
    %120 = tpu.matmul %117, %118, %cst_35 {dimension_numbers = #tpu.dot_dimension_numbers<[1], [0], [0], [1], [0, 0, 1, 1], [], []>} : vector<16x32xf32>, vector<32x128xf32>, vector<16x128xf32> -> vector<16x128xf32>
    %121 = vector.broadcast %119 : vector<1x128xf32> to vector<16x128xf32>
    %122 = arith.addf %120, %121 : vector<16x128xf32>
    %cst_36 = arith.constant 5.000000e-01 : f32
    %123 = vector.broadcast %cst_36 : f32 to vector<16x128xf32>
    %124 = arith.mulf %123, %122 : vector<16x128xf32>
    %cst_37 = arith.constant 0.707106769 : f32
    %125 = vector.broadcast %cst_37 : f32 to vector<16x128xf32>
    %126 = arith.mulf %122, %125 : vector<16x128xf32>
    %127 = math.absf %126 : vector<16x128xf32>
    %cst_38 = arith.constant 0.327591091 : f32
    %128 = vector.broadcast %cst_38 : f32 to vector<16x128xf32>
    %129 = arith.mulf %128, %127 : vector<16x128xf32>
    %cst_39 = arith.constant 1.000000e+00 : f32
    %130 = vector.broadcast %cst_39 : f32 to vector<16x128xf32>
    %131 = arith.addf %130, %129 : vector<16x128xf32>
    %cst_40 = arith.constant 1.000000e+00 : f32
    %132 = vector.broadcast %cst_40 : f32 to vector<16x128xf32>
    %133 = arith.divf %132, %131 : vector<16x128xf32>
    %cst_41 = arith.constant 1.06140542 : f32
    %134 = vector.broadcast %cst_41 : f32 to vector<16x128xf32>
    %135 = arith.mulf %134, %133 : vector<16x128xf32>
    %cst_42 = arith.constant -1.45315206 : f32
    %136 = vector.broadcast %cst_42 : f32 to vector<16x128xf32>
    %137 = arith.addf %135, %136 : vector<16x128xf32>
    %138 = arith.mulf %137, %133 : vector<16x128xf32>
    %cst_43 = arith.constant 1.42141378 : f32
    %139 = vector.broadcast %cst_43 : f32 to vector<16x128xf32>
    %140 = arith.addf %138, %139 : vector<16x128xf32>
    %141 = arith.mulf %140, %133 : vector<16x128xf32>
    %cst_44 = arith.constant -0.284496725 : f32
    %142 = vector.broadcast %cst_44 : f32 to vector<16x128xf32>
    %143 = arith.addf %141, %142 : vector<16x128xf32>
    %144 = arith.mulf %143, %133 : vector<16x128xf32>
    %cst_45 = arith.constant 0.254829586 : f32
    %145 = vector.broadcast %cst_45 : f32 to vector<16x128xf32>
    %146 = arith.addf %144, %145 : vector<16x128xf32>
    %147 = arith.mulf %146, %133 : vector<16x128xf32>
    %cst_46 = arith.constant 0.000000e+00 : f32
    %148 = vector.broadcast %cst_46 : f32 to vector<16x128xf32>
    %149 = arith.subf %148, %127 : vector<16x128xf32>
    %150 = arith.mulf %149, %127 : vector<16x128xf32>
    %151 = math.exp %150 : vector<16x128xf32>
    %152 = arith.mulf %147, %151 : vector<16x128xf32>
    %cst_47 = arith.constant 1.000000e+00 : f32
    %153 = vector.broadcast %cst_47 : f32 to vector<16x128xf32>
    %154 = arith.subf %153, %152 : vector<16x128xf32>
    %cst_48 = arith.constant 0.000000e+00 : f32
    %155 = vector.broadcast %cst_48 : f32 to vector<16x128xf32>
    %156 = arith.cmpf olt, %126, %155 : vector<16x128xf32>
    %cst_49 = arith.constant 0.000000e+00 : f32
    %157 = vector.broadcast %cst_49 : f32 to vector<16x128xf32>
    %158 = arith.subf %157, %154 : vector<16x128xf32>
    %159 = arith.select %156, %158, %154 : vector<16x128xi1>, vector<16x128xf32>
    %cst_50 = arith.constant 1.000000e+00 : f32
    %160 = vector.broadcast %cst_50 : f32 to vector<16x128xf32>
    %161 = arith.addf %160, %159 : vector<16x128xf32>
    %162 = arith.mulf %124, %161 : vector<16x128xf32>
    %c40 = arith.constant 40 : index
    %c0_51 = arith.constant 0 : index
    %163 = vector.load %arg3[%c40, %c0_51] : memref<48x256xf32, #tpu.memory_space<vmem>>, vector<1x32xf32>
    %c0_52 = arith.constant 0 : index
    %c0_53 = arith.constant 0 : index
    %164 = vector.load %arg4[%c0_52, %c0_53] : memref<128x32xf32, #tpu.memory_space<vmem>>, vector<128x32xf32>
    %cst_54 = arith.constant dense<0.000000e+00> : vector<16x32xf32>
    %165 = tpu.matmul %162, %164, %cst_54 {dimension_numbers = #tpu.dot_dimension_numbers<[1], [0], [0], [1], [0, 0, 1, 1], [], []>} : vector<16x128xf32>, vector<128x32xf32>, vector<16x32xf32> -> vector<16x32xf32>
    %166 = vector.broadcast %163 : vector<1x32xf32> to vector<16x32xf32>
    %167 = arith.addf %165, %166 : vector<16x32xf32>
    %168 = arith.addf %93, %167 : vector<16x32xf32>
    %169 = vector.shape_cast %168 : vector<16x32xf32> to vector<2x8x32xf32>
    %c0_55 = arith.constant 0 : index
    %c0_56 = arith.constant 0 : index
    %c0_57 = arith.constant 0 : index
    %170 = vector.load %arg5[%c0_55, %c0_56, %c0_57] : memref<2x8x32xf32, #tpu.memory_space<vmem>>, vector<2x8x32xf32>
    tpu.vector_store %arg5[%c0_55, %c0_56, %c0_57], %169 {strides = array<i32>} : memref<2x8x32xf32, #tpu.memory_space<vmem>>, vector<2x8x32xf32>,
    return
  }
  func.func @transform_0(%arg0: i32) -> (i32, i32, i32) {
    %c0_i32 = arith.constant 0 : i32
    %c0_i32_0 = arith.constant 0 : i32
    %c0_i32_1 = arith.constant 0 : i32
    %c0_i32_2 = arith.constant 0 : i32
    return %c0_i32, %c0_i32_0, %c0_i32_1 : i32, i32, i32
  }
  func.func @transform_1(%arg0: i32) -> (i32, i32, i32) {
    %c0_i32 = arith.constant 0 : i32
    %c0_i32_0 = arith.constant 0 : i32
    %c0_i32_1 = arith.constant 0 : i32
    %c0_i32_2 = arith.constant 0 : i32
    return %c0_i32, %c0_i32_0, %c0_i32_1 : i32, i32, i32
  }
  func.func @transform_2(%arg0: i32) -> (i32, i32) {
    %c0_i32 = arith.constant 0 : i32
    %c0_i32_0 = arith.constant 0 : i32
    %c0_i32_1 = arith.constant 0 : i32
    return %c0_i32, %c0_i32_0 : i32, i32
  }
  func.func @transform_3(%arg0: i32) -> (i32, i32) {
    %c0_i32 = arith.constant 0 : i32
    %c0_i32_0 = arith.constant 0 : i32
    %c0_i32_1 = arith.constant 0 : i32
    return %c0_i32, %c0_i32_0 : i32, i32
  }
  func.func @transform_4(%arg0: i32) -> (i32, i32, i32) {
    %c0_i32 = arith.constant 0 : i32
    %c0_i32_0 = arith.constant 0 : i32
    %c0_i32_1 = arith.constant 0 : i32
    %c0_i32_2 = arith.constant 0 : i32
    return %c0_i32, %c0_i32_0, %c0_i32_1 : i32, i32, i32
  }
}

</mosaic_0001>

<llo_original>
// kernel: cross_block.1
$region0: #{cross_block.1}
  #allocation0 [shape = 'u32[]', space=smem, size = 0x4, offset = 0x4, fixed_abs, tag = 'smem constant byte address 0x4 - core index']
  #allocation1 [shape = 'u32[144,128]{1,0:T(1,128)}', space=vmem, size = 0x12000, scoped, tag = 'internal scratch']
  %s0 = inlined_call_operand.vmem [shape: f32[2,8,32], index: 0, kind: input, shape index: {}]
  %s1 = inlined_call_operand.vmem [shape: f32[2,8,32], index: 1, kind: input, shape index: {}]
  %s2 = inlined_call_operand.vmem [shape: f32[48,256], index: 2, kind: input, shape index: {}]
  %s3 = inlined_call_operand.vmem [shape: f32[128,32], index: 3, kind: input, shape index: {}]
  %s4 = inlined_call_operand.hbm [shape: f32[2,8,32], index: 4, kind: output, shape index: {}]
  %s5 = sld [smem:[#allocation0]]
  $region26: #{cross_block.1} parent=0
    _
  %s7 = ssub.s32 1, %s5
  %s8 = scalar_select 0, %s7, %s5
  $region1: #{cross_block.1} parent=0
    #allocation2 [shape = 'u8[8192]{0}', space=vmem, size = 0x2000, scoped, tag = 'output window, operand 0, single buffered']
    #allocation3 [shape = 's32[1]{0}', space=sflag, size = 0x4, scoped, tag = 'scoped memory for cross_block.1']
    %9 = vsyncpa [#allocation3], 0
    // Predicated region
    $region2: #{cross_block.1} parent=1 // pred_check
      _
    $region3: #{cross_block.1} parent=1 // pred_check_branch
      %11 = sbr.rel (0) target = $region5
    $region4: #{cross_block.1} parent=1 // pred_region
      _
    $region5: #{cross_block.1} parent=1 // pred_fallthru
      _
    // Predicated region
    $region6: #{cross_block.1} parent=1 // pred_check
      _
    $region7: #{cross_block.1} parent=1 // pred_check_branch
      %13 = sbr.rel (0) target = $region9
    $region8: #{cross_block.1} parent=1 // pred_region
      _
    $region9: #{cross_block.1} parent=1 // pred_fallthru
      _
    // Predicated region
    $region10: #{cross_block.1} parent=1 // pred_check
      _
    $region11: #{cross_block.1} parent=1 // pred_check_branch
      %15 = sbr.rel (0) target = $region13
    $region12: #{cross_block.1} parent=1 // pred_region
      _
    $region13: #{cross_block.1} parent=1 // pred_fallthru
      _
    // Predicated region
    $region14: #{cross_block.1} parent=1 // pred_check
      _
    $region15: #{cross_block.1} parent=1 // pred_check_branch
      %17 = sbr.rel (0) target = $region17
    $region16: #{cross_block.1} parent=1 // pred_region
      _
    $region17: #{cross_block.1} parent=1 // pred_fallthru
      _
    %v18 = vld [vmem:[%s0] sm:$0xff]
    %v19 = vld [vmem:[%s0 + $0x8] sm:$0xff]
    %v20 = vld [vmem:[%s1] sm:$0xff]
    %v21 = vld [vmem:[%s1 + $0x8] sm:$0xff]
    %v22 = vld [vmem:[%s2 + $0x40] ss:$0 sm:$0xff]
    %v23 = vld [vmem:[%s2 + $0x41] ss:$0 sm:$0xff]
    %vm24 = vcmask 261120
    %v25 = vsel %vm24, %v18, 0.0
    %26 = vadd.xlane.f32.xlu0 %v25
    %v27 = vpop.xlane.xlu0 %26
    %v28 = vsel %vm24, %v19, 0.0
    %29 = vadd.xlane.f32.xlu0 %v28
    %v30 = vpop.xlane.xlu0 %29
    %v31 = vsel %vm24, %v20, 0.0
    %32 = vadd.xlane.f32.xlu0 %v31
    %v33 = vpop.xlane.xlu0 %32
    %v34 = vsel %vm24, %v21, 0.0
    %35 = vadd.xlane.f32.xlu0 %v34
    %v36 = vpop.xlane.xlu0 %35
    %v37 = vrcp.pop 32.0
    %v38 = vmul.f32 %v27, %v37
    %v39 = vmul.f32 %v30, %v37
    %v40 = vmul.f32 %v33, %v37
    %v41 = vmul.f32 %v36, %v37
    %v42 = vsub.f32 %v18, %v38
    %v43 = vsub.f32 %v19, %v39
    %v44 = vsub.f32 %v20, %v40
    %v45 = vsub.f32 %v21, %v41
    %v46 = vmul.f32 %v42, %v42
    %v47 = vmul.f32 %v43, %v43
    %v48 = vmul.f32 %v44, %v44
    %v49 = vmul.f32 %v45, %v45
    %v50 = vsel %vm24, %v46, 0.0
    %51 = vadd.xlane.f32.xlu0 %v50
    %v52 = vpop.xlane.xlu0 %51
    %v53 = vsel %vm24, %v47, 0.0
    %54 = vadd.xlane.f32.xlu0 %v53
    %v55 = vpop.xlane.xlu0 %54
    %v56 = vsel %vm24, %v48, 0.0
    %57 = vadd.xlane.f32.xlu0 %v56
    %v58 = vpop.xlane.xlu0 %57
    %v59 = vsel %vm24, %v49, 0.0
    %60 = vadd.xlane.f32.xlu0 %v59
    %v61 = vpop.xlane.xlu0 %60
    %v62 = vmul.f32 %v52, %v37
    %v63 = vmul.f32 %v55, %v37
    %v64 = vmul.f32 %v58, %v37
    %v65 = vmul.f32 %v61, %v37
    %v66 = vadd.f32 %v62, 1e-05
    %v67 = vadd.f32 %v63, 1e-05
    %v68 = vadd.f32 %v64, 1e-05
    %v69 = vadd.f32 %v65, 1e-05
    %v70 = vrsqrt.pop %v66
    %v71 = vrsqrt.pop %v67
    %v72 = vrsqrt.pop %v68
    %v73 = vrsqrt.pop %v69
    %v74 = vmul.f32 %v42, %v70
    %v75 = vmul.f32 %v43, %v71
    %v76 = vmul.f32 %v44, %v72
    %v77 = vmul.f32 %v45, %v73
    %v78 = vmul.f32 %v74, %v22
    %v79 = vmul.f32 %v75, %v22
    %v80 = vmul.f32 %v76, %v22
    %v81 = vmul.f32 %v77, %v22
    %v82 = vadd.f32 %v78, %v23
    %v83 = vadd.f32 %v79, %v23
    %v84 = vadd.f32 %v80, %v23
    %v85 = vadd.f32 %v81, %v23
    %v86 = vld [vmem:[%s2] sm:$0xff]
    %v87 = vld [vmem:[%s2 + $0x10] sm:$0xff]
    %v88 = vld [vmem:[%s2 + $0x20] sm:$0xff]
    %v89 = vld [vmem:[%s2 + $0x30] sm:$0xff]
    %v90 = vld [vmem:[%s2 + $0x42] ss:$0 sm:$0xff]
    %v91 = vld [vmem:[%s2 + $0x43] ss:$0 sm:$0xff]
    %v93 = vsel %vm24, %v82, 0
    %v96 = vsel %vm24, %v83, 0
    %98 = vmatprep.subr.mxu0 0.0
    %99 = vmatpush1.msra.mxu0 0.0
    %100 = vmatprep.subr.mxu0 0.0
    %101 = vmatpush1.msra.mxu0 0.0
    %102 = vmatprep.subr.mxu0 0.0
    %103 = vmatpush1.msra.mxu0 0.0
    %104 = vmatprep.subr.mxu0 0.0
    %105 = vmatpush1.msra.mxu0 0.0
    %106 = vmatprep.subr.mxu0 0.0
    %107 = vmatpush1.msra.mxu0 0.0
    %108 = vmatprep.subr.mxu0 0.0
    %109 = vmatpush1.msra.mxu0 0.0
    %110 = vmatprep.subr.mxu0 0.0
    %111 = vmatpush1.msra.mxu0 0.0
    %112 = vmatprep.subr.mxu0 0.0
    %113 = vmatpush1.msra.mxu0 0.0
    %114 = vmatprep.subr.mxu0 0.0
    %115 = vmatpush1.msra.mxu0 0.0
    %116 = vmatprep.subr.mxu0 0.0
    %117 = vmatpush1.msra.mxu0 0.0
    %118 = vmatprep.subr.mxu0 0.0
    %119 = vmatpush1.msra.mxu0 0.0
    %120 = vmatprep.subr.mxu0 0.0
    %121 = vmatpush1.msra.mxu0 0.0
    %122 = vmatprep.subr.mxu0 0.0
    %123 = vmatpush1.msra.mxu0 %v89
    %124 = vmatprep.subr.mxu0 0.0
    %125 = vmatpush1.msra.mxu0 %v88
    %126 = vmatprep.subr.mxu0 0.0
    %127 = vmatpush1.msra.mxu0 %v87
    %128 = vmatprep.subr.mxu0 0.0
    %129 = vmatpush1.msra.mxu0 %v86
    %130 = vmatprep.subr.mxu0 0.0
    %131 = vmatpush2.msra.mxu0 0.0
    %132 = vmatprep.subr.mxu0 0.0
    %133 = vmatpush2.msra.mxu0 0.0
    %134 = vmatprep.subr.mxu0 0.0
    %135 = vmatpush2.msra.mxu0 0.0
    %136 = vmatprep.subr.mxu0 0.0
    %137 = vmatpush2.msra.mxu0 0.0
    %138 = vmatprep.subr.mxu0 0.0
    %139 = vmatpush2.msra.mxu0 0.0
    %140 = vmatprep.subr.mxu0 0.0
    %141 = vmatpush2.msra.mxu0 0.0
    %142 = vmatprep.subr.mxu0 0.0
    %143 = vmatpush2.msra.mxu0 0.0
    %144 = vmatprep.subr.mxu0 0.0
    %145 = vmatpush2.msra.mxu0 0.0
    %146 = vmatprep.subr.mxu0 0.0
    %147 = vmatpush2.msra.mxu0 0.0
    %148 = vmatprep.subr.mxu0 0.0
    %149 = vmatpush2.msra.mxu0 0.0
    %150 = vmatprep.subr.mxu0 0.0
    %151 = vmatpush2.msra.mxu0 0.0
    %152 = vmatprep.subr.mxu0 0.0
    %153 = vmatpush2.msra.mxu0 0.0
    %154 = vmatprep.subr.mxu0 0.0
    %155 = vmatpush2.msra.mxu0 0.0
    %156 = vmatprep.subr.mxu0 0.0
    %157 = vmatpush2.msra.mxu0 0.0
    %158 = vmatprep.subr.mxu0 0.0
    %159 = vmatpush2.msra.mxu0 0.0
    %160 = vmatprep.subr.mxu0 0.0
    %161 = vmatpush2.msra.mxu0 0.0
    %162 = vmatprep.mubr.f32.mxu0 0.0
    %163 = vmatmul.mubr.f32.gmra.mxu0 %v93
    %v164 = vpop.f32.mrf.mxu0
    %v165 = vadd.f32 %v90, %v164
    %v166 = vpop.f32.mrf.mxu0
    %167 = vmatprep.mubr.f32.mxu0 0.0
    %168 = vmatmul.mubr.f32.gmra.mxu0 %v96
    %v169 = vpop.f32.mrf.mxu0
    %v170 = vadd.f32 %v90, %v169
    %v171 = vpop.f32.mrf.mxu0
    %172 = vdwg.mxu0
    %177 = vrot.lane.b32.xlu0 %v86, 96
    %v178 = vpop.permute.xlu0 %177
    %179 = vrot.lane.b32.xlu0 %v87, 96
    %v180 = vpop.permute.xlu0 %179
    %181 = vrot.lane.b32.xlu0 %v88, 96
    %v182 = vpop.permute.xlu0 %181
    %183 = vrot.lane.b32.xlu0 %v89, 96
    %v184 = vpop.permute.xlu0 %183
    %v190 = vsel %vm24, %v84, 0
    %v193 = vsel %vm24, %v85, 0
    %195 = vmatprep.subr.mxu0 0.0
    %196 = vmatpush1.msra.mxu0 0.0
    %197 = vmatprep.subr.mxu0 0.0
    %198 = vmatpush1.msra.mxu0 0.0
    %199 = vmatprep.subr.mxu0 0.0
    %200 = vmatpush1.msra.mxu0 0.0
    %201 = vmatprep.subr.mxu0 0.0
    %202 = vmatpush1.msra.mxu0 0.0
    %203 = vmatprep.subr.mxu0 0.0
    %204 = vmatpush1.msra.mxu0 0.0
    %205 = vmatprep.subr.mxu0 0.0
    %206 = vmatpush1.msra.mxu0 0.0
    %207 = vmatprep.subr.mxu0 0.0
    %208 = vmatpush1.msra.mxu0 0.0
    %209 = vmatprep.subr.mxu0 0.0
    %210 = vmatpush1.msra.mxu0 0.0
    %211 = vmatprep.subr.mxu0 0.0
    %212 = vmatpush1.msra.mxu0 0.0
    %213 = vmatprep.subr.mxu0 0.0
    %214 = vmatpush1.msra.mxu0 0.0
    %215 = vmatprep.subr.mxu0 0.0
    %216 = vmatpush1.msra.mxu0 0.0
    %217 = vmatprep.subr.mxu0 0.0
    %218 = vmatpush1.msra.mxu0 0.0
    %219 = vmatprep.subr.mxu0 0.0
    %220 = vmatpush1.msra.mxu0 %v184
    %221 = vmatprep.subr.mxu0 0.0
    %222 = vmatpush1.msra.mxu0 %v182
    %223 = vmatprep.subr.mxu0 0.0
    %224 = vmatpush1.msra.mxu0 %v180
    %225 = vmatprep.subr.mxu0 0.0
    %226 = vmatpush1.msra.mxu0 %v178
    %227 = vmatprep.subr.mxu0 0.0
    %228 = vmatpush2.msra.mxu0 0.0
    %229 = vmatprep.subr.mxu0 0.0
    %230 = vmatpush2.msra.mxu0 0.0
    %231 = vmatprep.subr.mxu0 0.0
    %232 = vmatpush2.msra.mxu0 0.0
    %233 = vmatprep.subr.mxu0 0.0
    %234 = vmatpush2.msra.mxu0 0.0
    %235 = vmatprep.subr.mxu0 0.0
    %236 = vmatpush2.msra.mxu0 0.0
    %237 = vmatprep.subr.mxu0 0.0
    %238 = vmatpush2.msra.mxu0 0.0
    %239 = vmatprep.subr.mxu0 0.0
    %240 = vmatpush2.msra.mxu0 0.0
    %241 = vmatprep.subr.mxu0 0.0
    %242 = vmatpush2.msra.mxu0 0.0
    %243 = vmatprep.subr.mxu0 0.0
    %244 = vmatpush2.msra.mxu0 0.0
    %245 = vmatprep.subr.mxu0 0.0
    %246 = vmatpush2.msra.mxu0 0.0
    %247 = vmatprep.subr.mxu0 0.0
    %248 = vmatpush2.msra.mxu0 0.0
    %249 = vmatprep.subr.mxu0 0.0
    %250 = vmatpush2.msra.mxu0 0.0
    %251 = vmatprep.subr.mxu0 0.0
    %252 = vmatpush2.msra.mxu0 0.0
    %253 = vmatprep.subr.mxu0 0.0
    %254 = vmatpush2.msra.mxu0 0.0
    %255 = vmatprep.subr.mxu0 0.0
    %256 = vmatpush2.msra.mxu0 0.0
    %257 = vmatprep.subr.mxu0 0.0
    %258 = vmatpush2.msra.mxu0 0.0
    %259 = vmatprep.mubr.f32.mxu0 0.0
    %260 = vmatmul.mubr.f32.gmra.mxu0 %v190
    %v261 = vpop.f32.mrf.mxu0
    %v262 = vadd.f32 %v91, %v261
    %v263 = vpop.f32.mrf.mxu0
    %264 = vmatprep.mubr.f32.mxu0 0.0
    %265 = vmatmul.mubr.f32.gmra.mxu0 %v193
    %v266 = vpop.f32.mrf.mxu0
    %v267 = vadd.f32 %v91, %v266
    %v268 = vpop.f32.mrf.mxu0
    %269 = vdwg.mxu0
    %272 = vrot.lane.b32.xlu0 %v165, 120
    %v273 = vpop.permute.xlu0 %272
    %274 = vrot.lane.b32.xlu0 %v170, 120
    %v275 = vpop.permute.xlu0 %274
    %276 = vrot.lane.b32.xlu0 %v165, 112
    %v277 = vpop.permute.xlu0 %276
    %278 = vrot.lane.b32.xlu0 %v170, 112
    %v279 = vpop.permute.xlu0 %278
    %280 = vrot.lane.b32.xlu0 %v165, 104
    %v281 = vpop.permute.xlu0 %280
    %282 = vrot.lane.b32.xlu0 %v170, 104
    %v283 = vpop.permute.xlu0 %282
    %286 = vrot.lane.b32.xlu0 %v262, 120
    %v287 = vpop.permute.xlu0 %286
    %288 = vrot.lane.b32.xlu0 %v267, 120
    %v289 = vpop.permute.xlu0 %288
    %290 = vrot.lane.b32.xlu0 %v262, 112
    %v291 = vpop.permute.xlu0 %290
    %292 = vrot.lane.b32.xlu0 %v267, 112
    %v293 = vpop.permute.xlu0 %292
    %294 = vrot.lane.b32.xlu0 %v262, 104
    %v295 = vpop.permute.xlu0 %294
    %296 = vrot.lane.b32.xlu0 %v267, 104
    %v297 = vpop.permute.xlu0 %296
    %vm298 = vcmask 64512
    %v299 = vsel %vm298, %v165, 0
    %v301 = vsel %vm298, %v262, 0
    %303 = vmatprep.subr.mxu0 0.0
    %304 = vmatpush1.xpose.msra.mxu0 0.0
    %305 = vmatprep.subr.mxu0 0.0
    %306 = vmatpush1.xpose.msra.mxu0 0.0
    %307 = vmatprep.subr.mxu0 0.0
    %308 = vmatpush1.xpose.msra.mxu0 0.0
    %309 = vmatprep.subr.mxu0 0.0
    %310 = vmatpush1.xpose.msra.mxu0 0.0
    %311 = vmatprep.subr.mxu0 0.0
    %312 = vmatpush1.xpose.msra.mxu0 0.0
    %313 = vmatprep.subr.mxu0 0.0
    %314 = vmatpush1.xpose.msra.mxu0 0.0
    %315 = vmatprep.subr.mxu0 0.0
    %316 = vmatpush1.xpose.msra.mxu0 0.0
    %317 = vmatprep.subr.mxu0 0.0
    %318 = vmatpush1.xpose.msra.mxu0 0.0
    %319 = vmatprep.subr.mxu0 0.0
    %320 = vmatpush1.xpose.msra.mxu0 0.0
    %321 = vmatprep.subr.mxu0 0.0
    %322 = vmatpush1.xpose.msra.mxu0 0.0
    %323 = vmatprep.subr.mxu0 0.0
    %324 = vmatpush1.xpose.msra.mxu0 0.0
    %325 = vmatprep.subr.mxu0 0.0
    %326 = vmatpush1.xpose.msra.mxu0 0.0
    %327 = vmatprep.subr.mxu0 0.0
    %328 = vmatpush1.xpose.msra.mxu0 0.0
    %329 = vmatprep.subr.mxu0 0.0
    %330 = vmatpush1.xpose.msra.mxu0 0.0
    %331 = vmatprep.subr.mxu0 0.0
    %332 = vmatpush1.xpose.msra.mxu0 0.0
    %333 = vmatprep.subr.mxu0 0.0
    %334 = vmatpush1.xpose.msra.mxu0 %v301
    %335 = vmatprep.subr.mxu0 0.0
    %336 = vmatpush2.xpose.msra.mxu0 0.0
    %337 = vmatprep.subr.mxu0 0.0
    %338 = vmatpush2.xpose.msra.mxu0 0.0
    %339 = vmatprep.subr.mxu0 0.0
    %340 = vmatpush2.xpose.msra.mxu0 0.0
    %341 = vmatprep.subr.mxu0 0.0
    %342 = vmatpush2.xpose.msra.mxu0 0.0
    %343 = vmatprep.subr.mxu0 0.0
    %344 = vmatpush2.xpose.msra.mxu0 0.0
    %345 = vmatprep.subr.mxu0 0.0
    %346 = vmatpush2.xpose.msra.mxu0 0.0
    %347 = vmatprep.subr.mxu0 0.0
    %348 = vmatpush2.xpose.msra.mxu0 0.0
    %349 = vmatprep.subr.mxu0 0.0
    %350 = vmatpush2.xpose.msra.mxu0 0.0
    %351 = vmatprep.subr.mxu0 0.0
    %352 = vmatpush2.xpose.msra.mxu0 0.0
    %353 = vmatprep.subr.mxu0 0.0
    %354 = vmatpush2.xpose.msra.mxu0 0.0
    %355 = vmatprep.subr.mxu0 0.0
    %356 = vmatpush2.xpose.msra.mxu0 0.0
    %357 = vmatprep.subr.mxu0 0.0
    %358 = vmatpush2.xpose.msra.mxu0 0.0
    %359 = vmatprep.subr.mxu0 0.0
    %360 = vmatpush2.xpose.msra.mxu0 0.0
    %361 = vmatprep.subr.mxu0 0.0
    %362 = vmatpush2.xpose.msra.mxu0 0.0
    %363 = vmatprep.subr.mxu0 0.0
    %364 = vmatpush2.xpose.msra.mxu0 0.0
    %365 = vmatprep.subr.mxu0 0.0
    %366 = vmatpush2.xpose.msra.mxu0 0.0
    %367 = vmatprep.mubr.f32.mxu0 0.0
    %368 = vmatmul.mubr.f32.gmra.mxu0 %v299
    %v369 = vpop.f32.mrf.mxu0
    %v370 = vadd.f32 0.0, %v369
    %v371 = vpop.f32.mrf.mxu0
    %372 = vdwg.mxu0
    %v373 = vsel %vm298, %v170, 0
    %v375 = vsel %vm298, %v267, 0
    %377 = vmatprep.subr.mxu0 0.0
    %378 = vmatpush1.xpose.msra.mxu0 0.0
    %379 = vmatprep.subr.mxu0 0.0
    %380 = vmatpush1.xpose.msra.mxu0 0.0
    %381 = vmatprep.subr.mxu0 0.0
    %382 = vmatpush1.xpose.msra.mxu0 0.0
    %383 = vmatprep.subr.mxu0 0.0
    %384 = vmatpush1.xpose.msra.mxu0 0.0
    %385 = vmatprep.subr.mxu0 0.0
    %386 = vmatpush1.xpose.msra.mxu0 0.0
    %387 = vmatprep.subr.mxu0 0.0
    %388 = vmatpush1.xpose.msra.mxu0 0.0
    %389 = vmatprep.subr.mxu0 0.0
    %390 = vmatpush1.xpose.msra.mxu0 0.0
    %391 = vmatprep.subr.mxu0 0.0
    %392 = vmatpush1.xpose.msra.mxu0 0.0
    %393 = vmatprep.subr.mxu0 0.0
    %394 = vmatpush1.xpose.msra.mxu0 0.0
    %395 = vmatprep.subr.mxu0 0.0
    %396 = vmatpush1.xpose.msra.mxu0 0.0
    %397 = vmatprep.subr.mxu0 0.0
    %398 = vmatpush1.xpose.msra.mxu0 0.0
    %399 = vmatprep.subr.mxu0 0.0
    %400 = vmatpush1.xpose.msra.mxu0 0.0
    %401 = vmatprep.subr.mxu0 0.0
    %402 = vmatpush1.xpose.msra.mxu0 0.0
    %403 = vmatprep.subr.mxu0 0.0
    %404 = vmatpush1.xpose.msra.mxu0 0.0
    %405 = vmatprep.subr.mxu0 0.0
    %406 = vmatpush1.xpose.msra.mxu0 0.0
    %407 = vmatprep.subr.mxu0 0.0
    %408 = vmatpush1.xpose.msra.mxu0 %v375
    %409 = vmatprep.subr.mxu0 0.0
    %410 = vmatpush2.xpose.msra.mxu0 0.0
    %411 = vmatprep.subr.mxu0 0.0
    %412 = vmatpush2.xpose.msra.mxu0 0.0
    %413 = vmatprep.subr.mxu0 0.0
    %414 = vmatpush2.xpose.msra.mxu0 0.0
    %415 = vmatprep.subr.mxu0 0.0
    %416 = vmatpush2.xpose.msra.mxu0 0.0
    %417 = vmatprep.subr.mxu0 0.0
    %418 = vmatpush2.xpose.msra.mxu0 0.0
    %419 = vmatprep.subr.mxu0 0.0
    %420 = vmatpush2.xpose.msra.mxu0 0.0
    %421 = vmatprep.subr.mxu0 0.0
    %422 = vmatpush2.xpose.msra.mxu0 0.0
    %423 = vmatprep.subr.mxu0 0.0
    %424 = vmatpush2.xpose.msra.mxu0 0.0
    %425 = vmatprep.subr.mxu0 0.0
    %426 = vmatpush2.xpose.msra.mxu0 0.0
    %427 = vmatprep.subr.mxu0 0.0
    %428 = vmatpush2.xpose.msra.mxu0 0.0
    %429 = vmatprep.subr.mxu0 0.0
    %430 = vmatpush2.xpose.msra.mxu0 0.0
    %431 = vmatprep.subr.mxu0 0.0
    %432 = vmatpush2.xpose.msra.mxu0 0.0
    %433 = vmatprep.subr.mxu0 0.0
    %434 = vmatpush2.xpose.msra.mxu0 0.0
    %435 = vmatprep.subr.mxu0 0.0
    %436 = vmatpush2.xpose.msra.mxu0 0.0
    %437 = vmatprep.subr.mxu0 0.0
    %438 = vmatpush2.xpose.msra.mxu0 0.0
    %439 = vmatprep.subr.mxu0 0.0
    %440 = vmatpush2.xpose.msra.mxu0 0.0
    %441 = vmatprep.mubr.f32.mxu0 0.0
    %442 = vmatmul.mubr.f32.gmra.mxu0 %v373
    %v443 = vpop.f32.mrf.mxu0
    %v444 = vadd.f32 0.0, %v443
    %v445 = vpop.f32.mrf.mxu0
    %446 = vdwg.mxu0
    %v447 = vsel %vm298, %v273, 0
    %v449 = vsel %vm298, %v287, 0
    %451 = vmatprep.subr.mxu0 0.0
    %452 = vmatpush1.xpose.msra.mxu0 0.0
    %453 = vmatprep.subr.mxu0 0.0
    %454 = vmatpush1.xpose.msra.mxu0 0.0
    %455 = vmatprep.subr.mxu0 0.0
    %456 = vmatpush1.xpose.msra.mxu0 0.0
    %457 = vmatprep.subr.mxu0 0.0
    %458 = vmatpush1.xpose.msra.mxu0 0.0
    %459 = vmatprep.subr.mxu0 0.0
    %460 = vmatpush1.xpose.msra.mxu0 0.0
    %461 = vmatprep.subr.mxu0 0.0
    %462 = vmatpush1.xpose.msra.mxu0 0.0
    %463 = vmatprep.subr.mxu0 0.0
    %464 = vmatpush1.xpose.msra.mxu0 0.0
    %465 = vmatprep.subr.mxu0 0.0
    %466 = vmatpush1.xpose.msra.mxu0 0.0
    %467 = vmatprep.subr.mxu0 0.0
    %468 = vmatpush1.xpose.msra.mxu0 0.0
    %469 = vmatprep.subr.mxu0 0.0
    %470 = vmatpush1.xpose.msra.mxu0 0.0
    %471 = vmatprep.subr.mxu0 0.0
    %472 = vmatpush1.xpose.msra.mxu0 0.0
    %473 = vmatprep.subr.mxu0 0.0
    %474 = vmatpush1.xpose.msra.mxu0 0.0
    %475 = vmatprep.subr.mxu0 0.0
    %476 = vmatpush1.xpose.msra.mxu0 0.0
    %477 = vmatprep.subr.mxu0 0.0
    %478 = vmatpush1.xpose.msra.mxu0 0.0
    %479 = vmatprep.subr.mxu0 0.0
    %480 = vmatpush1.xpose.msra.mxu0 0.0
    %481 = vmatprep.subr.mxu0 0.0
    %482 = vmatpush1.xpose.msra.mxu0 %v449
    %483 = vmatprep.subr.mxu0 0.0
    %484 = vmatpush2.xpose.msra.mxu0 0.0
    %485 = vmatprep.subr.mxu0 0.0
    %486 = vmatpush2.xpose.msra.mxu0 0.0
    %487 = vmatprep.subr.mxu0 0.0
    %488 = vmatpush2.xpose.msra.mxu0 0.0
    %489 = vmatprep.subr.mxu0 0.0
    %490 = vmatpush2.xpose.msra.mxu0 0.0
    %491 = vmatprep.subr.mxu0 0.0
    %492 = vmatpush2.xpose.msra.mxu0 0.0
    %493 = vmatprep.subr.mxu0 0.0
    %494 = vmatpush2.xpose.msra.mxu0 0.0
    %495 = vmatprep.subr.mxu0 0.0
    %496 = vmatpush2.xpose.msra.mxu0 0.0
    %497 = vmatprep.subr.mxu0 0.0
    %498 = vmatpush2.xpose.msra.mxu0 0.0
    %499 = vmatprep.subr.mxu0 0.0
    %500 = vmatpush2.xpose.msra.mxu0 0.0
    %501 = vmatprep.subr.mxu0 0.0
    %502 = vmatpush2.xpose.msra.mxu0 0.0
    %503 = vmatprep.subr.mxu0 0.0
    %504 = vmatpush2.xpose.msra.mxu0 0.0
    %505 = vmatprep.subr.mxu0 0.0
    %506 = vmatpush2.xpose.msra.mxu0 0.0
    %507 = vmatprep.subr.mxu0 0.0
    %508 = vmatpush2.xpose.msra.mxu0 0.0
    %509 = vmatprep.subr.mxu0 0.0
    %510 = vmatpush2.xpose.msra.mxu0 0.0
    %511 = vmatprep.subr.mxu0 0.0
    %512 = vmatpush2.xpose.msra.mxu0 0.0
    %513 = vmatprep.subr.mxu0 0.0
    %514 = vmatpush2.xpose.msra.mxu0 0.0
    %515 = vmatprep.mubr.f32.mxu0 0.0
    %516 = vmatmul.mubr.f32.gmra.mxu0 %v447
    %v517 = vpop.f32.mrf.mxu0
    %v518 = vadd.f32 0.0, %v517
    %v519 = vpop.f32.mrf.mxu0
    %520 = vdwg.mxu0
    %v521 = vsel %vm298, %v275, 0
    %v523 = vsel %vm298, %v289, 0
    %525 = vmatprep.subr.mxu0 0.0
    %526 = vmatpush1.xpose.msra.mxu0 0.0
    %527 = vmatprep.subr.mxu0 0.0
    %528 = vmatpush1.xpose.msra.mxu0 0.0
    %529 = vmatprep.subr.mxu0 0.0
    %530 = vmatpush1.xpose.msra.mxu0 0.0
    %531 = vmatprep.subr.mxu0 0.0
    %532 = vmatpush1.xpose.msra.mxu0 0.0
    %533 = vmatprep.subr.mxu0 0.0
    %534 = vmatpush1.xpose.msra.mxu0 0.0
    %535 = vmatprep.subr.mxu0 0.0
    %536 = vmatpush1.xpose.msra.mxu0 0.0
    %537 = vmatprep.subr.mxu0 0.0
    %538 = vmatpush1.xpose.msra.mxu0 0.0
    %539 = vmatprep.subr.mxu0 0.0
    %540 = vmatpush1.xpose.msra.mxu0 0.0
    %541 = vmatprep.subr.mxu0 0.0
    %542 = vmatpush1.xpose.msra.mxu0 0.0
    %543 = vmatprep.subr.mxu0 0.0
    %544 = vmatpush1.xpose.msra.mxu0 0.0
    %545 = vmatprep.subr.mxu0 0.0
    %546 = vmatpush1.xpose.msra.mxu0 0.0
    %547 = vmatprep.subr.mxu0 0.0
    %548 = vmatpush1.xpose.msra.mxu0 0.0
    %549 = vmatprep.subr.mxu0 0.0
    %550 = vmatpush1.xpose.msra.mxu0 0.0
    %551 = vmatprep.subr.mxu0 0.0
    %552 = vmatpush1.xpose.msra.mxu0 0.0
    %553 = vmatprep.subr.mxu0 0.0
    %554 = vmatpush1.xpose.msra.mxu0 0.0
    %555 = vmatprep.subr.mxu0 0.0
    %556 = vmatpush1.xpose.msra.mxu0 %v523
    %557 = vmatprep.subr.mxu0 0.0
    %558 = vmatpush2.xpose.msra.mxu0 0.0
    %559 = vmatprep.subr.mxu0 0.0
    %560 = vmatpush2.xpose.msra.mxu0 0.0
    %561 = vmatprep.subr.mxu0 0.0
    %562 = vmatpush2.xpose.msra.mxu0 0.0
    %563 = vmatprep.subr.mxu0 0.0
    %564 = vmatpush2.xpose.msra.mxu0 0.0
    %565 = vmatprep.subr.mxu0 0.0
    %566 = vmatpush2.xpose.msra.mxu0 0.0
    %567 = vmatprep.subr.mxu0 0.0
    %568 = vmatpush2.xpose.msra.mxu0 0.0
    %569 = vmatprep.subr.mxu0 0.0
    %570 = vmatpush2.xpose.msra.mxu0 0.0
    %571 = vmatprep.subr.mxu0 0.0
    %572 = vmatpush2.xpose.msra.mxu0 0.0
    %573 = vmatprep.subr.mxu0 0.0
    %574 = vmatpush2.xpose.msra.mxu0 0.0
    %575 = vmatprep.subr.mxu0 0.0
    %576 = vmatpush2.xpose.msra.mxu0 0.0
    %577 = vmatprep.subr.mxu0 0.0
    %578 = vmatpush2.xpose.msra.mxu0 0.0
    %579 = vmatprep.subr.mxu0 0.0
    %580 = vmatpush2.xpose.msra.mxu0 0.0
    %581 = vmatprep.subr.mxu0 0.0
    %582 = vmatpush2.xpose.msra.mxu0 0.0
    %583 = vmatprep.subr.mxu0 0.0
    %584 = vmatpush2.xpose.msra.mxu0 0.0
    %585 = vmatprep.subr.mxu0 0.0
    %586 = vmatpush2.xpose.msra.mxu0 0.0
    %587 = vmatprep.subr.mxu0 0.0
    %588 = vmatpush2.xpose.msra.mxu0 0.0
    %589 = vmatprep.mubr.f32.mxu0 0.0
    %590 = vmatmul.mubr.f32.gmra.mxu0 %v521
    %v591 = vpop.f32.mrf.mxu0
    %v592 = vadd.f32 0.0, %v591
    %v593 = vpop.f32.mrf.mxu0
    %594 = vdwg.mxu0
    %v595 = vsel %vm298, %v277, 0
    %v597 = vsel %vm298, %v291, 0
    %599 = vmatprep.subr.mxu0 0.0
    %600 = vmatpush1.xpose.msra.mxu0 0.0
    %601 = vmatprep.subr.mxu0 0.0
    %602 = vmatpush1.xpose.msra.mxu0 0.0
    %603 = vmatprep.subr.mxu0 0.0
    %604 = vmatpush1.xpose.msra.mxu0 0.0
    %605 = vmatprep.subr.mxu0 0.0
    %606 = vmatpush1.xpose.msra.mxu0 0.0
    %607 = vmatprep.subr.mxu0 0.0
    %608 = vmatpush1.xpose.msra.mxu0 0.0
    %609 = vmatprep.subr.mxu0 0.0
    %610 = vmatpush1.xpose.msra.mxu0 0.0
    %611 = vmatprep.subr.mxu0 0.0
    %612 = vmatpush1.xpose.msra.mxu0 0.0
    %613 = vmatprep.subr.mxu0 0.0
    %614 = vmatpush1.xpose.msra.mxu0 0.0
    %615 = vmatprep.subr.mxu0 0.0
    %616 = vmatpush1.xpose.msra.mxu0 0.0
    %617 = vmatprep.subr.mxu0 0.0
    %618 = vmatpush1.xpose.msra.mxu0 0.0
    %619 = vmatprep.subr.mxu0 0.0
    %620 = vmatpush1.xpose.msra.mxu0 0.0
    %621 = vmatprep.subr.mxu0 0.0
    %622 = vmatpush1.xpose.msra.mxu0 0.0
    %623 = vmatprep.subr.mxu0 0.0
    %624 = vmatpush1.xpose.msra.mxu0 0.0
    %625 = vmatprep.subr.mxu0 0.0
    %626 = vmatpush1.xpose.msra.mxu0 0.0
    %627 = vmatprep.subr.mxu0 0.0
    %628 = vmatpush1.xpose.msra.mxu0 0.0
    %629 = vmatprep.subr.mxu0 0.0
    %630 = vmatpush1.xpose.msra.mxu0 %v597
    %631 = vmatprep.subr.mxu0 0.0
    %632 = vmatpush2.xpose.msra.mxu0 0.0
    %633 = vmatprep.subr.mxu0 0.0
    %634 = vmatpush2.xpose.msra.mxu0 0.0
    %635 = vmatprep.subr.mxu0 0.0
    %636 = vmatpush2.xpose.msra.mxu0 0.0
    %637 = vmatprep.subr.mxu0 0.0
    %638 = vmatpush2.xpose.msra.mxu0 0.0
    %639 = vmatprep.subr.mxu0 0.0
    %640 = vmatpush2.xpose.msra.mxu0 0.0
    %641 = vmatprep.subr.mxu0 0.0
    %642 = vmatpush2.xpose.msra.mxu0 0.0
    %643 = vmatprep.subr.mxu0 0.0
    %644 = vmatpush2.xpose.msra.mxu0 0.0
    %645 = vmatprep.subr.mxu0 0.0
    %646 = vmatpush2.xpose.msra.mxu0 0.0
    %647 = vmatprep.subr.mxu0 0.0
    %648 = vmatpush2.xpose.msra.mxu0 0.0
    %649 = vmatprep.subr.mxu0 0.0
    %650 = vmatpush2.xpose.msra.mxu0 0.0
    %651 = vmatprep.subr.mxu0 0.0
    %652 = vmatpush2.xpose.msra.mxu0 0.0
    %653 = vmatprep.subr.mxu0 0.0
    %654 = vmatpush2.xpose.msra.mxu0 0.0
    %655 = vmatprep.subr.mxu0 0.0
    %656 = vmatpush2.xpose.msra.mxu0 0.0
    %657 = vmatprep.subr.mxu0 0.0
    %658 = vmatpush2.xpose.msra.mxu0 0.0
    %659 = vmatprep.subr.mxu0 0.0
    %660 = vmatpush2.xpose.msra.mxu0 0.0
    %661 = vmatprep.subr.mxu0 0.0
    %662 = vmatpush2.xpose.msra.mxu0 0.0
    %663 = vmatprep.mubr.f32.mxu0 0.0
    %664 = vmatmul.mubr.f32.gmra.mxu0 %v595
    %v665 = vpop.f32.mrf.mxu0
    %v666 = vadd.f32 0.0, %v665
    %v667 = vpop.f32.mrf.mxu0
    %668 = vdwg.mxu0
    %v669 = vsel %vm298, %v279, 0
    %v671 = vsel %vm298, %v293, 0
    %673 = vmatprep.subr.mxu0 0.0
    %674 = vmatpush1.xpose.msra.mxu0 0.0
    %675 = vmatprep.subr.mxu0 0.0
    %676 = vmatpush1.xpose.msra.mxu0 0.0
    %677 = vmatprep.subr.mxu0 0.0
    %678 = vmatpush1.xpose.msra.mxu0 0.0
    %679 = vmatprep.subr.mxu0 0.0
    %680 = vmatpush1.xpose.msra.mxu0 0.0
    %681 = vmatprep.subr.mxu0 0.0
    %682 = vmatpush1.xpose.msra.mxu0 0.0
    %683 = vmatprep.subr.mxu0 0.0
    %684 = vmatpush1.xpose.msra.mxu0 0.0
    %685 = vmatprep.subr.mxu0 0.0
    %686 = vmatpush1.xpose.msra.mxu0 0.0
    %687 = vmatprep.subr.mxu0 0.0
    %688 = vmatpush1.xpose.msra.mxu0 0.0
    %689 = vmatprep.subr.mxu0 0.0
    %690 = vmatpush1.xpose.msra.mxu0 0.0
    %691 = vmatprep.subr.mxu0 0.0
    %692 = vmatpush1.xpose.msra.mxu0 0.0
    %693 = vmatprep.subr.mxu0 0.0
    %694 = vmatpush1.xpose.msra.mxu0 0.0
    %695 = vmatprep.subr.mxu0 0.0
    %696 = vmatpush1.xpose.msra.mxu0 0.0
    %697 = vmatprep.subr.mxu0 0.0
    %698 = vmatpush1.xpose.msra.mxu0 0.0
    %699 = vmatprep.subr.mxu0 0.0
    %700 = vmatpush1.xpose.msra.mxu0 0.0
    %701 = vmatprep.subr.mxu0 0.0
    %702 = vmatpush1.xpose.msra.mxu0 0.0
    %703 = vmatprep.subr.mxu0 0.0
    %704 = vmatpush1.xpose.msra.mxu0 %v671
    %705 = vmatprep.subr.mxu0 0.0
    %706 = vmatpush2.xpose.msra.mxu0 0.0
    %707 = vmatprep.subr.mxu0 0.0
    %708 = vmatpush2.xpose.msra.mxu0 0.0
    %709 = vmatprep.subr.mxu0 0.0
    %710 = vmatpush2.xpose.msra.mxu0 0.0
    %711 = vmatprep.subr.mxu0 0.0
    %712 = vmatpush2.xpose.msra.mxu0 0.0
    %713 = vmatprep.subr.mxu0 0.0
    %714 = vmatpush2.xpose.msra.mxu0 0.0
    %715 = vmatprep.subr.mxu0 0.0
    %716 = vmatpush2.xpose.msra.mxu0 0.0
    %717 = vmatprep.subr.mxu0 0.0
    %718 = vmatpush2.xpose.msra.mxu0 0.0
    %719 = vmatprep.subr.mxu0 0.0
    %720 = vmatpush2.xpose.msra.mxu0 0.0
    %721 = vmatprep.subr.mxu0 0.0
    %722 = vmatpush2.xpose.msra.mxu0 0.0
    %723 = vmatprep.subr.mxu0 0.0
    %724 = vmatpush2.xpose.msra.mxu0 0.0
    %725 = vmatprep.subr.mxu0 0.0
    %726 = vmatpush2.xpose.msra.mxu0 0.0
    %727 = vmatprep.subr.mxu0 0.0
    %728 = vmatpush2.xpose.msra.mxu0 0.0
    %729 = vmatprep.subr.mxu0 0.0
    %730 = vmatpush2.xpose.msra.mxu0 0.0
    %731 = vmatprep.subr.mxu0 0.0
    %732 = vmatpush2.xpose.msra.mxu0 0.0
    %733 = vmatprep.subr.mxu0 0.0
    %734 = vmatpush2.xpose.msra.mxu0 0.0
    %735 = vmatprep.subr.mxu0 0.0
    %736 = vmatpush2.xpose.msra.mxu0 0.0
    %737 = vmatprep.mubr.f32.mxu0 0.0
    %738 = vmatmul.mubr.f32.gmra.mxu0 %v669
    %v739 = vpop.f32.mrf.mxu0
    %v740 = vadd.f32 0.0, %v739
    %v741 = vpop.f32.mrf.mxu0
    %742 = vdwg.mxu0
    %v743 = vsel %vm298, %v281, 0
    %v745 = vsel %vm298, %v295, 0
    %747 = vmatprep.subr.mxu0 0.0
    %748 = vmatpush1.xpose.msra.mxu0 0.0
    %749 = vmatprep.subr.mxu0 0.0
    %750 = vmatpush1.xpose.msra.mxu0 0.0
    %751 = vmatprep.subr.mxu0 0.0
    %752 = vmatpush1.xpose.msra.mxu0 0.0
    %753 = vmatprep.subr.mxu0 0.0
    %754 = vmatpush1.xpose.msra.mxu0 0.0
    %755 = vmatprep.subr.mxu0 0.0
    %756 = vmatpush1.xpose.msra.mxu0 0.0
    %757 = vmatprep.subr.mxu0 0.0
    %758 = vmatpush1.xpose.msra.mxu0 0.0
    %759 = vmatprep.subr.mxu0 0.0
    %760 = vmatpush1.xpose.msra.mxu0 0.0
    %761 = vmatprep.subr.mxu0 0.0
    %762 = vmatpush1.xpose.msra.mxu0 0.0
    %763 = vmatprep.subr.mxu0 0.0
    %764 = vmatpush1.xpose.msra.mxu0 0.0
    %765 = vmatprep.subr.mxu0 0.0
    %766 = vmatpush1.xpose.msra.mxu0 0.0
    %767 = vmatprep.subr.mxu0 0.0
    %768 = vmatpush1.xpose.msra.mxu0 0.0
    %769 = vmatprep.subr.mxu0 0.0
    %770 = vmatpush1.xpose.msra.mxu0 0.0
    %771 = vmatprep.subr.mxu0 0.0
    %772 = vmatpush1.xpose.msra.mxu0 0.0
    %773 = vmatprep.subr.mxu0 0.0
    %774 = vmatpush1.xpose.msra.mxu0 0.0
    %775 = vmatprep.subr.mxu0 0.0
    %776 = vmatpush1.xpose.msra.mxu0 0.0
    %777 = vmatprep.subr.mxu0 0.0
    %778 = vmatpush1.xpose.msra.mxu0 %v745
    %779 = vmatprep.subr.mxu0 0.0
    %780 = vmatpush2.xpose.msra.mxu0 0.0
    %781 = vmatprep.subr.mxu0 0.0
    %782 = vmatpush2.xpose.msra.mxu0 0.0
    %783 = vmatprep.subr.mxu0 0.0
    %784 = vmatpush2.xpose.msra.mxu0 0.0
    %785 = vmatprep.subr.mxu0 0.0
    %786 = vmatpush2.xpose.msra.mxu0 0.0
    %787 = vmatprep.subr.mxu0 0.0
    %788 = vmatpush2.xpose.msra.mxu0 0.0
    %789 = vmatprep.subr.mxu0 0.0
    %790 = vmatpush2.xpose.msra.mxu0 0.0
    %791 = vmatprep.subr.mxu0 0.0
    %792 = vmatpush2.xpose.msra.mxu0 0.0
    %793 = vmatprep.subr.mxu0 0.0
    %794 = vmatpush2.xpose.msra.mxu0 0.0
    %795 = vmatprep.subr.mxu0 0.0
    %796 = vmatpush2.xpose.msra.mxu0 0.0
    %797 = vmatprep.subr.mxu0 0.0
    %798 = vmatpush2.xpose.msra.mxu0 0.0
    %799 = vmatprep.subr.mxu0 0.0
    %800 = vmatpush2.xpose.msra.mxu0 0.0
    %801 = vmatprep.subr.mxu0 0.0
    %802 = vmatpush2.xpose.msra.mxu0 0.0
    %803 = vmatprep.subr.mxu0 0.0
    %804 = vmatpush2.xpose.msra.mxu0 0.0
    %805 = vmatprep.subr.mxu0 0.0
    %806 = vmatpush2.xpose.msra.mxu0 0.0
    %807 = vmatprep.subr.mxu0 0.0
    %808 = vmatpush2.xpose.msra.mxu0 0.0
    %809 = vmatprep.subr.mxu0 0.0
    %810 = vmatpush2.xpose.msra.mxu0 0.0
    %811 = vmatprep.mubr.f32.mxu0 0.0
    %812 = vmatmul.mubr.f32.gmra.mxu0 %v743
    %v813 = vpop.f32.mrf.mxu0
    %v814 = vadd.f32 0.0, %v813
    %v815 = vpop.f32.mrf.mxu0
    %816 = vdwg.mxu0
    %v817 = vsel %vm298, %v283, 0
    %v819 = vsel %vm298, %v297, 0
    %821 = vmatprep.subr.mxu0 0.0
    %822 = vmatpush1.xpose.msra.mxu0 0.0
    %823 = vmatprep.subr.mxu0 0.0
    %824 = vmatpush1.xpose.msra.mxu0 0.0
    %825 = vmatprep.subr.mxu0 0.0
    %826 = vmatpush1.xpose.msra.mxu0 0.0
    %827 = vmatprep.subr.mxu0 0.0
    %828 = vmatpush1.xpose.msra.mxu0 0.0
    %829 = vmatprep.subr.mxu0 0.0
    %830 = vmatpush1.xpose.msra.mxu0 0.0
    %831 = vmatprep.subr.mxu0 0.0
    %832 = vmatpush1.xpose.msra.mxu0 0.0
    %833 = vmatprep.subr.mxu0 0.0
    %834 = vmatpush1.xpose.msra.mxu0 0.0
    %835 = vmatprep.subr.mxu0 0.0
    %836 = vmatpush1.xpose.msra.mxu0 0.0
    %837 = vmatprep.subr.mxu0 0.0
    %838 = vmatpush1.xpose.msra.mxu0 0.0
    %839 = vmatprep.subr.mxu0 0.0
    %840 = vmatpush1.xpose.msra.mxu0 0.0
    %841 = vmatprep.subr.mxu0 0.0
    %842 = vmatpush1.xpose.msra.mxu0 0.0
    %843 = vmatprep.subr.mxu0 0.0
    %844 = vmatpush1.xpose.msra.mxu0 0.0
    %845 = vmatprep.subr.mxu0 0.0
    %846 = vmatpush1.xpose.msra.mxu0 0.0
    %847 = vmatprep.subr.mxu0 0.0
    %848 = vmatpush1.xpose.msra.mxu0 0.0
    %849 = vmatprep.subr.mxu0 0.0
    %850 = vmatpush1.xpose.msra.mxu0 0.0
    %851 = vmatprep.subr.mxu0 0.0
    %852 = vmatpush1.xpose.msra.mxu0 %v819
    %853 = vmatprep.subr.mxu0 0.0
    %854 = vmatpush2.xpose.msra.mxu0 0.0
    %855 = vmatprep.subr.mxu0 0.0
    %856 = vmatpush2.xpose.msra.mxu0 0.0
    %857 = vmatprep.subr.mxu0 0.0
    %858 = vmatpush2.xpose.msra.mxu0 0.0
    %859 = vmatprep.subr.mxu0 0.0
    %860 = vmatpush2.xpose.msra.mxu0 0.0
    %861 = vmatprep.subr.mxu0 0.0
    %862 = vmatpush2.xpose.msra.mxu0 0.0
    %863 = vmatprep.subr.mxu0 0.0
    %864 = vmatpush2.xpose.msra.mxu0 0.0
    %865 = vmatprep.subr.mxu0 0.0
    %866 = vmatpush2.xpose.msra.mxu0 0.0
    %867 = vmatprep.subr.mxu0 0.0
    %868 = vmatpush2.xpose.msra.mxu0 0.0
    %869 = vmatprep.subr.mxu0 0.0
    %870 = vmatpush2.xpose.msra.mxu0 0.0
    %871 = vmatprep.subr.mxu0 0.0
    %872 = vmatpush2.xpose.msra.mxu0 0.0
    %873 = vmatprep.subr.mxu0 0.0
    %874 = vmatpush2.xpose.msra.mxu0 0.0
    %875 = vmatprep.subr.mxu0 0.0
    %876 = vmatpush2.xpose.msra.mxu0 0.0
    %877 = vmatprep.subr.mxu0 0.0
    %878 = vmatpush2.xpose.msra.mxu0 0.0
    %879 = vmatprep.subr.mxu0 0.0
    %880 = vmatpush2.xpose.msra.mxu0 0.0
    %881 = vmatprep.subr.mxu0 0.0
    %882 = vmatpush2.xpose.msra.mxu0 0.0
    %883 = vmatprep.subr.mxu0 0.0
    %884 = vmatpush2.xpose.msra.mxu0 0.0
    %885 = vmatprep.mubr.f32.mxu0 0.0
    %886 = vmatmul.mubr.f32.gmra.mxu0 %v817
    %v887 = vpop.f32.mrf.mxu0
    %v888 = vadd.f32 0.0, %v887
    %v889 = vpop.f32.mrf.mxu0
    %890 = vdwg.mxu0
    %v891 = vsel %vm298, %v370, -inf
    %892 = vmax.xlane.f32.xlu0 %v891
    %v893 = vpop.xlane.xlu0 %892
    %v894 = vsel %vm298, %v444, -inf
    %895 = vmax.xlane.f32.xlu0 %v894
    %v896 = vpop.xlane.xlu0 %895
    %v897 = vsel %vm298, %v518, -inf
    %898 = vmax.xlane.f32.xlu0 %v897
    %v899 = vpop.xlane.xlu0 %898
    %v900 = vsel %vm298, %v592, -inf
    %901 = vmax.xlane.f32.xlu0 %v900
    %v902 = vpop.xlane.xlu0 %901
    %v903 = vsel %vm298, %v666, -inf
    %904 = vmax.xlane.f32.xlu0 %v903
    %v905 = vpop.xlane.xlu0 %904
    %v906 = vsel %vm298, %v740, -inf
    %907 = vmax.xlane.f32.xlu0 %v906
    %v908 = vpop.xlane.xlu0 %907
    %v909 = vsel %vm298, %v814, -inf
    %910 = vmax.xlane.f32.xlu0 %v909
    %v911 = vpop.xlane.xlu0 %910
    %v912 = vsel %vm298, %v888, -inf
    %913 = vmax.xlane.f32.xlu0 %v912
    %v914 = vpop.xlane.xlu0 %913
    %v915 = vsub.f32 %v370, %v893
    %v916 = vsub.f32 %v444, %v896
    %v917 = vsub.f32 %v518, %v899
    %v918 = vsub.f32 %v592, %v902
    %v919 = vsub.f32 %v666, %v905
    %v920 = vsub.f32 %v740, %v908
    %v921 = vsub.f32 %v814, %v911
    %v922 = vsub.f32 %v888, %v914
    %v923 = vmul.f32 %v915, 1.442695
    %v924 = vpow.pop %v923
    %v925 = vmul.f32 %v916, 1.442695
    %v926 = vpow.pop %v925
    %v927 = vmul.f32 %v917, 1.442695
    %v928 = vpow.pop %v927
    %v929 = vmul.f32 %v918, 1.442695
    %v930 = vpow.pop %v929
    %v931 = vmul.f32 %v919, 1.442695
    %v932 = vpow.pop %v931
    %v933 = vmul.f32 %v920, 1.442695
    %v934 = vpow.pop %v933
    %v935 = vmul.f32 %v921, 1.442695
    %v936 = vpow.pop %v935
    %v937 = vmul.f32 %v922, 1.442695
    %v938 = vpow.pop %v937
    %v939 = vsel %vm298, %v924, 0.0
    %940 = vadd.xlane.f32.xlu0 %v939
    %v941 = vpop.xlane.xlu0 %940
    %v942 = vsel %vm298, %v926, 0.0
    %943 = vadd.xlane.f32.xlu0 %v942
    %v944 = vpop.xlane.xlu0 %943
    %v945 = vsel %vm298, %v928, 0.0
    %946 = vadd.xlane.f32.xlu0 %v945
    %v947 = vpop.xlane.xlu0 %946
    %v948 = vsel %vm298, %v930, 0.0
    %949 = vadd.xlane.f32.xlu0 %v948
    %v950 = vpop.xlane.xlu0 %949
    %v951 = vsel %vm298, %v932, 0.0
    %952 = vadd.xlane.f32.xlu0 %v951
    %v953 = vpop.xlane.xlu0 %952
    %v954 = vsel %vm298, %v934, 0.0
    %955 = vadd.xlane.f32.xlu0 %v954
    %v956 = vpop.xlane.xlu0 %955
    %v957 = vsel %vm298, %v936, 0.0
    %958 = vadd.xlane.f32.xlu0 %v957
    %v959 = vpop.xlane.xlu0 %958
    %v960 = vsel %vm298, %v938, 0.0
    %961 = vadd.xlane.f32.xlu0 %v960
    %v962 = vpop.xlane.xlu0 %961
    %v963 = vrcp.pop %v941
    %v964 = vmul.f32 %v924, %v963
    %v965 = vrcp.pop %v944
    %v966 = vmul.f32 %v926, %v965
    %v967 = vrcp.pop %v947
    %v968 = vmul.f32 %v928, %v967
    %v969 = vrcp.pop %v950
    %v970 = vmul.f32 %v930, %v969
    %v971 = vrcp.pop %v953
    %v972 = vmul.f32 %v932, %v971
    %v973 = vrcp.pop %v956
    %v974 = vmul.f32 %v934, %v973
    %v975 = vrcp.pop %v959
    %v976 = vmul.f32 %v936, %v975
    %v977 = vrcp.pop %v962
    %v978 = vmul.f32 %v938, %v977
    %979 = vrot.lane.b32.xlu0 %v262, 96
    %v980 = vpop.permute.xlu0 %979
    %v983 = vsel %vm298, %v964, 0
    %985 = vmatprep.subr.mxu0 0.0
    %986 = vmatpush1.msra.mxu0 0.0
    %987 = vmatprep.subr.mxu0 0.0
    %988 = vmatpush1.msra.mxu0 0.0
    %989 = vmatprep.subr.mxu0 0.0
    %990 = vmatpush1.msra.mxu0 0.0
    %991 = vmatprep.subr.mxu0 0.0
    %992 = vmatpush1.msra.mxu0 0.0
    %993 = vmatprep.subr.mxu0 0.0
    %994 = vmatpush1.msra.mxu0 0.0
    %995 = vmatprep.subr.mxu0 0.0
    %996 = vmatpush1.msra.mxu0 0.0
    %997 = vmatprep.subr.mxu0 0.0
    %998 = vmatpush1.msra.mxu0 0.0
    %999 = vmatprep.subr.mxu0 0.0
    %1000 = vmatpush1.msra.mxu0 0.0
    %1001 = vmatprep.subr.mxu0 0.0
    %1002 = vmatpush1.msra.mxu0 0.0
    %1003 = vmatprep.subr.mxu0 0.0
    %1004 = vmatpush1.msra.mxu0 0.0
    %1005 = vmatprep.subr.mxu0 0.0
    %1006 = vmatpush1.msra.mxu0 0.0
    %1007 = vmatprep.subr.mxu0 0.0
    %1008 = vmatpush1.msra.mxu0 0.0
    %1009 = vmatprep.subr.mxu0 0.0
    %1010 = vmatpush1.msra.mxu0 0.0
    %1011 = vmatprep.subr.mxu0 0.0
    %1012 = vmatpush1.msra.mxu0 0.0
    %1013 = vmatprep.subr.mxu0 0.0
    %1014 = vmatpush1.msra.mxu0 0.0
    %1015 = vmatprep.subr.mxu0 0.0
    %1016 = vmatpush1.msra.mxu0 %v980
    %1017 = vmatprep.subr.mxu0 0.0
    %1018 = vmatpush2.msra.mxu0 0.0
    %1019 = vmatprep.subr.mxu0 0.0
    %1020 = vmatpush2.msra.mxu0 0.0
    %1021 = vmatprep.subr.mxu0 0.0
    %1022 = vmatpush2.msra.mxu0 0.0
    %1023 = vmatprep.subr.mxu0 0.0
    %1024 = vmatpush2.msra.mxu0 0.0
    %1025 = vmatprep.subr.mxu0 0.0
    %1026 = vmatpush2.msra.mxu0 0.0
    %1027 = vmatprep.subr.mxu0 0.0
    %1028 = vmatpush2.msra.mxu0 0.0
    %1029 = vmatprep.subr.mxu0 0.0
    %1030 = vmatpush2.msra.mxu0 0.0
    %1031 = vmatprep.subr.mxu0 0.0
    %1032 = vmatpush2.msra.mxu0 0.0
    %1033 = vmatprep.subr.mxu0 0.0
    %1034 = vmatpush2.msra.mxu0 0.0
    %1035 = vmatprep.subr.mxu0 0.0
    %1036 = vmatpush2.msra.mxu0 0.0
    %1037 = vmatprep.subr.mxu0 0.0
    %1038 = vmatpush2.msra.mxu0 0.0
    %1039 = vmatprep.subr.mxu0 0.0
    %1040 = vmatpush2.msra.mxu0 0.0
    %1041 = vmatprep.subr.mxu0 0.0
    %1042 = vmatpush2.msra.mxu0 0.0
    %1043 = vmatprep.subr.mxu0 0.0
    %1044 = vmatpush2.msra.mxu0 0.0
    %1045 = vmatprep.subr.mxu0 0.0
    %1046 = vmatpush2.msra.mxu0 0.0
    %1047 = vmatprep.subr.mxu0 0.0
    %1048 = vmatpush2.msra.mxu0 0.0
    %1049 = vmatprep.mubr.f32.mxu0 0.0
    %1050 = vmatmul.mubr.f32.gmra.mxu0 %v983
    %v1051 = vpop.f32.mrf.mxu0
    %v1052 = vadd.f32 0.0, %v1051
    %v1053 = vpop.f32.mrf.mxu0
    %1054 = vdwg.mxu0
    %1055 = vrot.lane.b32.xlu0 %v267, 96
    %v1056 = vpop.permute.xlu0 %1055
    %v1059 = vsel %vm298, %v966, 0
    %1061 = vmatprep.subr.mxu0 0.0
    %1062 = vmatpush1.msra.mxu0 0.0
    %1063 = vmatprep.subr.mxu0 0.0
    %1064 = vmatpush1.msra.mxu0 0.0
    %1065 = vmatprep.subr.mxu0 0.0
    %1066 = vmatpush1.msra.mxu0 0.0
    %1067 = vmatprep.subr.mxu0 0.0
    %1068 = vmatpush1.msra.mxu0 0.0
    %1069 = vmatprep.subr.mxu0 0.0
    %1070 = vmatpush1.msra.mxu0 0.0
    %1071 = vmatprep.subr.mxu0 0.0
    %1072 = vmatpush1.msra.mxu0 0.0
    %1073 = vmatprep.subr.mxu0 0.0
    %1074 = vmatpush1.msra.mxu0 0.0
    %1075 = vmatprep.subr.mxu0 0.0
    %1076 = vmatpush1.msra.mxu0 0.0
    %1077 = vmatprep.subr.mxu0 0.0
    %1078 = vmatpush1.msra.mxu0 0.0
    %1079 = vmatprep.subr.mxu0 0.0
    %1080 = vmatpush1.msra.mxu0 0.0
    %1081 = vmatprep.subr.mxu0 0.0
    %1082 = vmatpush1.msra.mxu0 0.0
    %1083 = vmatprep.subr.mxu0 0.0
    %1084 = vmatpush1.msra.mxu0 0.0
    %1085 = vmatprep.subr.mxu0 0.0
    %1086 = vmatpush1.msra.mxu0 0.0
    %1087 = vmatprep.subr.mxu0 0.0
    %1088 = vmatpush1.msra.mxu0 0.0
    %1089 = vmatprep.subr.mxu0 0.0
    %1090 = vmatpush1.msra.mxu0 0.0
    %1091 = vmatprep.subr.mxu0 0.0
    %1092 = vmatpush1.msra.mxu0 %v1056
    %1093 = vmatprep.subr.mxu0 0.0
    %1094 = vmatpush2.msra.mxu0 0.0
    %1095 = vmatprep.subr.mxu0 0.0
    %1096 = vmatpush2.msra.mxu0 0.0
    %1097 = vmatprep.subr.mxu0 0.0
    %1098 = vmatpush2.msra.mxu0 0.0
    %1099 = vmatprep.subr.mxu0 0.0
    %1100 = vmatpush2.msra.mxu0 0.0
    %1101 = vmatprep.subr.mxu0 0.0
    %1102 = vmatpush2.msra.mxu0 0.0
    %1103 = vmatprep.subr.mxu0 0.0
    %1104 = vmatpush2.msra.mxu0 0.0
    %1105 = vmatprep.subr.mxu0 0.0
    %1106 = vmatpush2.msra.mxu0 0.0
    %1107 = vmatprep.subr.mxu0 0.0
    %1108 = vmatpush2.msra.mxu0 0.0
    %1109 = vmatprep.subr.mxu0 0.0
    %1110 = vmatpush2.msra.mxu0 0.0
    %1111 = vmatprep.subr.mxu0 0.0
    %1112 = vmatpush2.msra.mxu0 0.0
    %1113 = vmatprep.subr.mxu0 0.0
    %1114 = vmatpush2.msra.mxu0 0.0
    %1115 = vmatprep.subr.mxu0 0.0
    %1116 = vmatpush2.msra.mxu0 0.0
    %1117 = vmatprep.subr.mxu0 0.0
    %1118 = vmatpush2.msra.mxu0 0.0
    %1119 = vmatprep.subr.mxu0 0.0
    %1120 = vmatpush2.msra.mxu0 0.0
    %1121 = vmatprep.subr.mxu0 0.0
    %1122 = vmatpush2.msra.mxu0 0.0
    %1123 = vmatprep.subr.mxu0 0.0
    %1124 = vmatpush2.msra.mxu0 0.0
    %1125 = vmatprep.mubr.f32.mxu0 0.0
    %1126 = vmatmul.mubr.f32.gmra.mxu0 %v1059
    %v1127 = vpop.f32.mrf.mxu0
    %v1128 = vadd.f32 0.0, %v1127
    %v1129 = vpop.f32.mrf.mxu0
    %1130 = vdwg.mxu0
    %1131 = vrot.lane.b32.xlu0 %v287, 96
    %v1132 = vpop.permute.xlu0 %1131
    %v1135 = vsel %vm298, %v968, 0
    %1137 = vmatprep.subr.mxu0 0.0
    %1138 = vmatpush1.msra.mxu0 0.0
    %1139 = vmatprep.subr.mxu0 0.0
    %1140 = vmatpush1.msra.mxu0 0.0
    %1141 = vmatprep.subr.mxu0 0.0
    %1142 = vmatpush1.msra.mxu0 0.0
    %1143 = vmatprep.subr.mxu0 0.0
    %1144 = vmatpush1.msra.mxu0 0.0
    %1145 = vmatprep.subr.mxu0 0.0
    %1146 = vmatpush1.msra.mxu0 0.0
    %1147 = vmatprep.subr.mxu0 0.0
    %1148 = vmatpush1.msra.mxu0 0.0
    %1149 = vmatprep.subr.mxu0 0.0
    %1150 = vmatpush1.msra.mxu0 0.0
    %1151 = vmatprep.subr.mxu0 0.0
    %1152 = vmatpush1.msra.mxu0 0.0
    %1153 = vmatprep.subr.mxu0 0.0
    %1154 = vmatpush1.msra.mxu0 0.0
    %1155 = vmatprep.subr.mxu0 0.0
    %1156 = vmatpush1.msra.mxu0 0.0
    %1157 = vmatprep.subr.mxu0 0.0
    %1158 = vmatpush1.msra.mxu0 0.0
    %1159 = vmatprep.subr.mxu0 0.0
    %1160 = vmatpush1.msra.mxu0 0.0
    %1161 = vmatprep.subr.mxu0 0.0
    %1162 = vmatpush1.msra.mxu0 0.0
    %1163 = vmatprep.subr.mxu0 0.0
    %1164 = vmatpush1.msra.mxu0 0.0
    %1165 = vmatprep.subr.mxu0 0.0
    %1166 = vmatpush1.msra.mxu0 0.0
    %1167 = vmatprep.subr.mxu0 0.0
    %1168 = vmatpush1.msra.mxu0 %v1132
    %1169 = vmatprep.subr.mxu0 0.0
    %1170 = vmatpush2.msra.mxu0 0.0
    %1171 = vmatprep.subr.mxu0 0.0
    %1172 = vmatpush2.msra.mxu0 0.0
    %1173 = vmatprep.subr.mxu0 0.0
    %1174 = vmatpush2.msra.mxu0 0.0
    %1175 = vmatprep.subr.mxu0 0.0
    %1176 = vmatpush2.msra.mxu0 0.0
    %1177 = vmatprep.subr.mxu0 0.0
    %1178 = vmatpush2.msra.mxu0 0.0
    %1179 = vmatprep.subr.mxu0 0.0
    %1180 = vmatpush2.msra.mxu0 0.0
    %1181 = vmatprep.subr.mxu0 0.0
    %1182 = vmatpush2.msra.mxu0 0.0
    %1183 = vmatprep.subr.mxu0 0.0
    %1184 = vmatpush2.msra.mxu0 0.0
    %1185 = vmatprep.subr.mxu0 0.0
    %1186 = vmatpush2.msra.mxu0 0.0
    %1187 = vmatprep.subr.mxu0 0.0
    %1188 = vmatpush2.msra.mxu0 0.0
    %1189 = vmatprep.subr.mxu0 0.0
    %1190 = vmatpush2.msra.mxu0 0.0
    %1191 = vmatprep.subr.mxu0 0.0
    %1192 = vmatpush2.msra.mxu0 0.0
    %1193 = vmatprep.subr.mxu0 0.0
    %1194 = vmatpush2.msra.mxu0 0.0
    %1195 = vmatprep.subr.mxu0 0.0
    %1196 = vmatpush2.msra.mxu0 0.0
    %1197 = vmatprep.subr.mxu0 0.0
    %1198 = vmatpush2.msra.mxu0 0.0
    %1199 = vmatprep.subr.mxu0 0.0
    %1200 = vmatpush2.msra.mxu0 0.0
    %1201 = vmatprep.mubr.f32.mxu0 0.0
    %1202 = vmatmul.mubr.f32.gmra.mxu0 %v1135
    %v1203 = vpop.f32.mrf.mxu0
    %v1204 = vadd.f32 0.0, %v1203
    %v1205 = vpop.f32.mrf.mxu0
    %1206 = vdwg.mxu0
    %1207 = vrot.lane.b32.xlu0 %v289, 96
    %v1208 = vpop.permute.xlu0 %1207
    %v1211 = vsel %vm298, %v970, 0
    %1213 = vmatprep.subr.mxu0 0.0
    %1214 = vmatpush1.msra.mxu0 0.0
    %1215 = vmatprep.subr.mxu0 0.0
    %1216 = vmatpush1.msra.mxu0 0.0
    %1217 = vmatprep.subr.mxu0 0.0
    %1218 = vmatpush1.msra.mxu0 0.0
    %1219 = vmatprep.subr.mxu0 0.0
    %1220 = vmatpush1.msra.mxu0 0.0
    %1221 = vmatprep.subr.mxu0 0.0
    %1222 = vmatpush1.msra.mxu0 0.0
    %1223 = vmatprep.subr.mxu0 0.0
    %1224 = vmatpush1.msra.mxu0 0.0
    %1225 = vmatprep.subr.mxu0 0.0
    %1226 = vmatpush1.msra.mxu0 0.0
    %1227 = vmatprep.subr.mxu0 0.0
    %1228 = vmatpush1.msra.mxu0 0.0
    %1229 = vmatprep.subr.mxu0 0.0
    %1230 = vmatpush1.msra.mxu0 0.0
    %1231 = vmatprep.subr.mxu0 0.0
    %1232 = vmatpush1.msra.mxu0 0.0
    %1233 = vmatprep.subr.mxu0 0.0
    %1234 = vmatpush1.msra.mxu0 0.0
    %1235 = vmatprep.subr.mxu0 0.0
    %1236 = vmatpush1.msra.mxu0 0.0
    %1237 = vmatprep.subr.mxu0 0.0
    %1238 = vmatpush1.msra.mxu0 0.0
    %1239 = vmatprep.subr.mxu0 0.0
    %1240 = vmatpush1.msra.mxu0 0.0
    %1241 = vmatprep.subr.mxu0 0.0
    %1242 = vmatpush1.msra.mxu0 0.0
    %1243 = vmatprep.subr.mxu0 0.0
    %1244 = vmatpush1.msra.mxu0 %v1208
    %1245 = vmatprep.subr.mxu0 0.0
    %1246 = vmatpush2.msra.mxu0 0.0
    %1247 = vmatprep.subr.mxu0 0.0
    %1248 = vmatpush2.msra.mxu0 0.0
    %1249 = vmatprep.subr.mxu0 0.0
    %1250 = vmatpush2.msra.mxu0 0.0
    %1251 = vmatprep.subr.mxu0 0.0
    %1252 = vmatpush2.msra.mxu0 0.0
    %1253 = vmatprep.subr.mxu0 0.0
    %1254 = vmatpush2.msra.mxu0 0.0
    %1255 = vmatprep.subr.mxu0 0.0
    %1256 = vmatpush2.msra.mxu0 0.0
    %1257 = vmatprep.subr.mxu0 0.0
    %1258 = vmatpush2.msra.mxu0 0.0
    %1259 = vmatprep.subr.mxu0 0.0
    %1260 = vmatpush2.msra.mxu0 0.0
    %1261 = vmatprep.subr.mxu0 0.0
    %1262 = vmatpush2.msra.mxu0 0.0
    %1263 = vmatprep.subr.mxu0 0.0
    %1264 = vmatpush2.msra.mxu0 0.0
    %1265 = vmatprep.subr.mxu0 0.0
    %1266 = vmatpush2.msra.mxu0 0.0
    %1267 = vmatprep.subr.mxu0 0.0
    %1268 = vmatpush2.msra.mxu0 0.0
    %1269 = vmatprep.subr.mxu0 0.0
    %1270 = vmatpush2.msra.mxu0 0.0
    %1271 = vmatprep.subr.mxu0 0.0
    %1272 = vmatpush2.msra.mxu0 0.0
    %1273 = vmatprep.subr.mxu0 0.0
    %1274 = vmatpush2.msra.mxu0 0.0
    %1275 = vmatprep.subr.mxu0 0.0
    %1276 = vmatpush2.msra.mxu0 0.0
    %1277 = vmatprep.mubr.f32.mxu0 0.0
    %1278 = vmatmul.mubr.f32.gmra.mxu0 %v1211
    %v1279 = vpop.f32.mrf.mxu0
    %v1280 = vadd.f32 0.0, %v1279
    %v1281 = vpop.f32.mrf.mxu0
    %1282 = vdwg.mxu0
    %1283 = vrot.lane.b32.xlu0 %v291, 96
    %v1284 = vpop.permute.xlu0 %1283
    %v1287 = vsel %vm298, %v972, 0
    %1289 = vmatprep.subr.mxu0 0.0
    %1290 = vmatpush1.msra.mxu0 0.0
    %1291 = vmatprep.subr.mxu0 0.0
    %1292 = vmatpush1.msra.mxu0 0.0
    %1293 = vmatprep.subr.mxu0 0.0
    %1294 = vmatpush1.msra.mxu0 0.0
    %1295 = vmatprep.subr.mxu0 0.0
    %1296 = vmatpush1.msra.mxu0 0.0
    %1297 = vmatprep.subr.mxu0 0.0
    %1298 = vmatpush1.msra.mxu0 0.0
    %1299 = vmatprep.subr.mxu0 0.0
    %1300 = vmatpush1.msra.mxu0 0.0
    %1301 = vmatprep.subr.mxu0 0.0
    %1302 = vmatpush1.msra.mxu0 0.0
    %1303 = vmatprep.subr.mxu0 0.0
    %1304 = vmatpush1.msra.mxu0 0.0
    %1305 = vmatprep.subr.mxu0 0.0
    %1306 = vmatpush1.msra.mxu0 0.0
    %1307 = vmatprep.subr.mxu0 0.0
    %1308 = vmatpush1.msra.mxu0 0.0
    %1309 = vmatprep.subr.mxu0 0.0
    %1310 = vmatpush1.msra.mxu0 0.0
    %1311 = vmatprep.subr.mxu0 0.0
    %1312 = vmatpush1.msra.mxu0 0.0
    %1313 = vmatprep.subr.mxu0 0.0
    %1314 = vmatpush1.msra.mxu0 0.0
    %1315 = vmatprep.subr.mxu0 0.0
    %1316 = vmatpush1.msra.mxu0 0.0
    %1317 = vmatprep.subr.mxu0 0.0
    %1318 = vmatpush1.msra.mxu0 0.0
    %1319 = vmatprep.subr.mxu0 0.0
    %1320 = vmatpush1.msra.mxu0 %v1284
    %1321 = vmatprep.subr.mxu0 0.0
    %1322 = vmatpush2.msra.mxu0 0.0
    %1323 = vmatprep.subr.mxu0 0.0
    %1324 = vmatpush2.msra.mxu0 0.0
    %1325 = vmatprep.subr.mxu0 0.0
    %1326 = vmatpush2.msra.mxu0 0.0
    %1327 = vmatprep.subr.mxu0 0.0
    %1328 = vmatpush2.msra.mxu0 0.0
    %1329 = vmatprep.subr.mxu0 0.0
    %1330 = vmatpush2.msra.mxu0 0.0
    %1331 = vmatprep.subr.mxu0 0.0
    %1332 = vmatpush2.msra.mxu0 0.0
    %1333 = vmatprep.subr.mxu0 0.0
    %1334 = vmatpush2.msra.mxu0 0.0
    %1335 = vmatprep.subr.mxu0 0.0
    %1336 = vmatpush2.msra.mxu0 0.0
    %1337 = vmatprep.subr.mxu0 0.0
    %1338 = vmatpush2.msra.mxu0 0.0
    %1339 = vmatprep.subr.mxu0 0.0
    %1340 = vmatpush2.msra.mxu0 0.0
    %1341 = vmatprep.subr.mxu0 0.0
    %1342 = vmatpush2.msra.mxu0 0.0
    %1343 = vmatprep.subr.mxu0 0.0
    %1344 = vmatpush2.msra.mxu0 0.0
    %1345 = vmatprep.subr.mxu0 0.0
    %1346 = vmatpush2.msra.mxu0 0.0
    %1347 = vmatprep.subr.mxu0 0.0
    %1348 = vmatpush2.msra.mxu0 0.0
    %1349 = vmatprep.subr.mxu0 0.0
    %1350 = vmatpush2.msra.mxu0 0.0
    %1351 = vmatprep.subr.mxu0 0.0
    %1352 = vmatpush2.msra.mxu0 0.0
    %1353 = vmatprep.mubr.f32.mxu0 0.0
    %1354 = vmatmul.mubr.f32.gmra.mxu0 %v1287
    %v1355 = vpop.f32.mrf.mxu0
    %v1356 = vadd.f32 0.0, %v1355
    %v1357 = vpop.f32.mrf.mxu0
    %1358 = vdwg.mxu0
    %1359 = vrot.lane.b32.xlu0 %v293, 96
    %v1360 = vpop.permute.xlu0 %1359
    %v1363 = vsel %vm298, %v974, 0
    %1365 = vmatprep.subr.mxu0 0.0
    %1366 = vmatpush1.msra.mxu0 0.0
    %1367 = vmatprep.subr.mxu0 0.0
    %1368 = vmatpush1.msra.mxu0 0.0
    %1369 = vmatprep.subr.mxu0 0.0
    %1370 = vmatpush1.msra.mxu0 0.0
    %1371 = vmatprep.subr.mxu0 0.0
    %1372 = vmatpush1.msra.mxu0 0.0
    %1373 = vmatprep.subr.mxu0 0.0
    %1374 = vmatpush1.msra.mxu0 0.0
    %1375 = vmatprep.subr.mxu0 0.0
    %1376 = vmatpush1.msra.mxu0 0.0
    %1377 = vmatprep.subr.mxu0 0.0
    %1378 = vmatpush1.msra.mxu0 0.0
    %1379 = vmatprep.subr.mxu0 0.0
    %1380 = vmatpush1.msra.mxu0 0.0
    %1381 = vmatprep.subr.mxu0 0.0
    %1382 = vmatpush1.msra.mxu0 0.0
    %1383 = vmatprep.subr.mxu0 0.0
    %1384 = vmatpush1.msra.mxu0 0.0
    %1385 = vmatprep.subr.mxu0 0.0
    %1386 = vmatpush1.msra.mxu0 0.0
    %1387 = vmatprep.subr.mxu0 0.0
    %1388 = vmatpush1.msra.mxu0 0.0
    %1389 = vmatprep.subr.mxu0 0.0
    %1390 = vmatpush1.msra.mxu0 0.0
    %1391 = vmatprep.subr.mxu0 0.0
    %1392 = vmatpush1.msra.mxu0 0.0
    %1393 = vmatprep.subr.mxu0 0.0
    %1394 = vmatpush1.msra.mxu0 0.0
    %1395 = vmatprep.subr.mxu0 0.0
    %1396 = vmatpush1.msra.mxu0 %v1360
    %1397 = vmatprep.subr.mxu0 0.0
    %1398 = vmatpush2.msra.mxu0 0.0
    %1399 = vmatprep.subr.mxu0 0.0
    %1400 = vmatpush2.msra.mxu0 0.0
    %1401 = vmatprep.subr.mxu0 0.0
    %1402 = vmatpush2.msra.mxu0 0.0
    %1403 = vmatprep.subr.mxu0 0.0
    %1404 = vmatpush2.msra.mxu0 0.0
    %1405 = vmatprep.subr.mxu0 0.0
    %1406 = vmatpush2.msra.mxu0 0.0
    %1407 = vmatprep.subr.mxu0 0.0
    %1408 = vmatpush2.msra.mxu0 0.0
    %1409 = vmatprep.subr.mxu0 0.0
    %1410 = vmatpush2.msra.mxu0 0.0
    %1411 = vmatprep.subr.mxu0 0.0
    %1412 = vmatpush2.msra.mxu0 0.0
    %1413 = vmatprep.subr.mxu0 0.0
    %1414 = vmatpush2.msra.mxu0 0.0
    %1415 = vmatprep.subr.mxu0 0.0
    %1416 = vmatpush2.msra.mxu0 0.0
    %1417 = vmatprep.subr.mxu0 0.0
    %1418 = vmatpush2.msra.mxu0 0.0
    %1419 = vmatprep.subr.mxu0 0.0
    %1420 = vmatpush2.msra.mxu0 0.0
    %1421 = vmatprep.subr.mxu0 0.0
    %1422 = vmatpush2.msra.mxu0 0.0
    %1423 = vmatprep.subr.mxu0 0.0
    %1424 = vmatpush2.msra.mxu0 0.0
    %1425 = vmatprep.subr.mxu0 0.0
    %1426 = vmatpush2.msra.mxu0 0.0
    %1427 = vmatprep.subr.mxu0 0.0
    %1428 = vmatpush2.msra.mxu0 0.0
    %1429 = vmatprep.mubr.f32.mxu0 0.0
    %1430 = vmatmul.mubr.f32.gmra.mxu0 %v1363
    %v1431 = vpop.f32.mrf.mxu0
    %v1432 = vadd.f32 0.0, %v1431
    %v1433 = vpop.f32.mrf.mxu0
    %1434 = vdwg.mxu0
    %1435 = vrot.lane.b32.xlu0 %v295, 96
    %v1436 = vpop.permute.xlu0 %1435
    %v1439 = vsel %vm298, %v976, 0
    %1441 = vmatprep.subr.mxu0 0.0
    %1442 = vmatpush1.msra.mxu0 0.0
    %1443 = vmatprep.subr.mxu0 0.0
    %1444 = vmatpush1.msra.mxu0 0.0
    %1445 = vmatprep.subr.mxu0 0.0
    %1446 = vmatpush1.msra.mxu0 0.0
    %1447 = vmatprep.subr.mxu0 0.0
    %1448 = vmatpush1.msra.mxu0 0.0
    %1449 = vmatprep.subr.mxu0 0.0
    %1450 = vmatpush1.msra.mxu0 0.0
    %1451 = vmatprep.subr.mxu0 0.0
    %1452 = vmatpush1.msra.mxu0 0.0
    %1453 = vmatprep.subr.mxu0 0.0
    %1454 = vmatpush1.msra.mxu0 0.0
    %1455 = vmatprep.subr.mxu0 0.0
    %1456 = vmatpush1.msra.mxu0 0.0
    %1457 = vmatprep.subr.mxu0 0.0
    %1458 = vmatpush1.msra.mxu0 0.0
    %1459 = vmatprep.subr.mxu0 0.0
    %1460 = vmatpush1.msra.mxu0 0.0
    %1461 = vmatprep.subr.mxu0 0.0
    %1462 = vmatpush1.msra.mxu0 0.0
    %1463 = vmatprep.subr.mxu0 0.0
    %1464 = vmatpush1.msra.mxu0 0.0
    %1465 = vmatprep.subr.mxu0 0.0
    %1466 = vmatpush1.msra.mxu0 0.0
    %1467 = vmatprep.subr.mxu0 0.0
    %1468 = vmatpush1.msra.mxu0 0.0
    %1469 = vmatprep.subr.mxu0 0.0
    %1470 = vmatpush1.msra.mxu0 0.0
    %1471 = vmatprep.subr.mxu0 0.0
    %1472 = vmatpush1.msra.mxu0 %v1436
    %1473 = vmatprep.subr.mxu0 0.0
    %1474 = vmatpush2.msra.mxu0 0.0
    %1475 = vmatprep.subr.mxu0 0.0
    %1476 = vmatpush2.msra.mxu0 0.0
    %1477 = vmatprep.subr.mxu0 0.0
    %1478 = vmatpush2.msra.mxu0 0.0
    %1479 = vmatprep.subr.mxu0 0.0
    %1480 = vmatpush2.msra.mxu0 0.0
    %1481 = vmatprep.subr.mxu0 0.0
    %1482 = vmatpush2.msra.mxu0 0.0
    %1483 = vmatprep.subr.mxu0 0.0
    %1484 = vmatpush2.msra.mxu0 0.0
    %1485 = vmatprep.subr.mxu0 0.0
    %1486 = vmatpush2.msra.mxu0 0.0
    %1487 = vmatprep.subr.mxu0 0.0
    %1488 = vmatpush2.msra.mxu0 0.0
    %1489 = vmatprep.subr.mxu0 0.0
    %1490 = vmatpush2.msra.mxu0 0.0
    %1491 = vmatprep.subr.mxu0 0.0
    %1492 = vmatpush2.msra.mxu0 0.0
    %1493 = vmatprep.subr.mxu0 0.0
    %1494 = vmatpush2.msra.mxu0 0.0
    %1495 = vmatprep.subr.mxu0 0.0
    %1496 = vmatpush2.msra.mxu0 0.0
    %1497 = vmatprep.subr.mxu0 0.0
    %1498 = vmatpush2.msra.mxu0 0.0
    %1499 = vmatprep.subr.mxu0 0.0
    %1500 = vmatpush2.msra.mxu0 0.0
    %1501 = vmatprep.subr.mxu0 0.0
    %1502 = vmatpush2.msra.mxu0 0.0
    %1503 = vmatprep.subr.mxu0 0.0
    %1504 = vmatpush2.msra.mxu0 0.0
    %1505 = vmatprep.mubr.f32.mxu0 0.0
    %1506 = vmatmul.mubr.f32.gmra.mxu0 %v1439
    %v1507 = vpop.f32.mrf.mxu0
    %v1508 = vadd.f32 0.0, %v1507
    %v1509 = vpop.f32.mrf.mxu0
    %1510 = vdwg.mxu0
    %1511 = vrot.lane.b32.xlu0 %v297, 96
    %v1512 = vpop.permute.xlu0 %1511
    %v1515 = vsel %vm298, %v978, 0
    %1517 = vmatprep.subr.mxu0 0.0
    %1518 = vmatpush1.msra.mxu0 0.0
    %1519 = vmatprep.subr.mxu0 0.0
    %1520 = vmatpush1.msra.mxu0 0.0
    %1521 = vmatprep.subr.mxu0 0.0
    %1522 = vmatpush1.msra.mxu0 0.0
    %1523 = vmatprep.subr.mxu0 0.0
    %1524 = vmatpush1.msra.mxu0 0.0
    %1525 = vmatprep.subr.mxu0 0.0
    %1526 = vmatpush1.msra.mxu0 0.0
    %1527 = vmatprep.subr.mxu0 0.0
    %1528 = vmatpush1.msra.mxu0 0.0
    %1529 = vmatprep.subr.mxu0 0.0
    %1530 = vmatpush1.msra.mxu0 0.0
    %1531 = vmatprep.subr.mxu0 0.0
    %1532 = vmatpush1.msra.mxu0 0.0
    %1533 = vmatprep.subr.mxu0 0.0
    %1534 = vmatpush1.msra.mxu0 0.0
    %1535 = vmatprep.subr.mxu0 0.0
    %1536 = vmatpush1.msra.mxu0 0.0
    %1537 = vmatprep.subr.mxu0 0.0
    %1538 = vmatpush1.msra.mxu0 0.0
    %1539 = vmatprep.subr.mxu0 0.0
    %1540 = vmatpush1.msra.mxu0 0.0
    %1541 = vmatprep.subr.mxu0 0.0
    %1542 = vmatpush1.msra.mxu0 0.0
    %1543 = vmatprep.subr.mxu0 0.0
    %1544 = vmatpush1.msra.mxu0 0.0
    %1545 = vmatprep.subr.mxu0 0.0
    %1546 = vmatpush1.msra.mxu0 0.0
    %1547 = vmatprep.subr.mxu0 0.0
    %1548 = vmatpush1.msra.mxu0 %v1512
    %1549 = vmatprep.subr.mxu0 0.0
    %1550 = vmatpush2.msra.mxu0 0.0
    %1551 = vmatprep.subr.mxu0 0.0
    %1552 = vmatpush2.msra.mxu0 0.0
    %1553 = vmatprep.subr.mxu0 0.0
    %1554 = vmatpush2.msra.mxu0 0.0
    %1555 = vmatprep.subr.mxu0 0.0
    %1556 = vmatpush2.msra.mxu0 0.0
    %1557 = vmatprep.subr.mxu0 0.0
    %1558 = vmatpush2.msra.mxu0 0.0
    %1559 = vmatprep.subr.mxu0 0.0
    %1560 = vmatpush2.msra.mxu0 0.0
    %1561 = vmatprep.subr.mxu0 0.0
    %1562 = vmatpush2.msra.mxu0 0.0
    %1563 = vmatprep.subr.mxu0 0.0
    %1564 = vmatpush2.msra.mxu0 0.0
    %1565 = vmatprep.subr.mxu0 0.0
    %1566 = vmatpush2.msra.mxu0 0.0
    %1567 = vmatprep.subr.mxu0 0.0
    %1568 = vmatpush2.msra.mxu0 0.0
    %1569 = vmatprep.subr.mxu0 0.0
    %1570 = vmatpush2.msra.mxu0 0.0
    %1571 = vmatprep.subr.mxu0 0.0
    %1572 = vmatpush2.msra.mxu0 0.0
    %1573 = vmatprep.subr.mxu0 0.0
    %1574 = vmatpush2.msra.mxu0 0.0
    %1575 = vmatprep.subr.mxu0 0.0
    %1576 = vmatpush2.msra.mxu0 0.0
    %1577 = vmatprep.subr.mxu0 0.0
    %1578 = vmatpush2.msra.mxu0 0.0
    %1579 = vmatprep.subr.mxu0 0.0
    %1580 = vmatpush2.msra.mxu0 0.0
    %1581 = vmatprep.mubr.f32.mxu0 0.0
    %1582 = vmatmul.mubr.f32.gmra.mxu0 %v1515
    %v1583 = vpop.f32.mrf.mxu0
    %v1584 = vadd.f32 0.0, %v1583
    %v1585 = vpop.f32.mrf.mxu0
    %1586 = vdwg.mxu0
    %1589 = vrot.lane.b32.xlu0 %v1204, 8
    %v1590 = vpop.permute.xlu0 %1589
    %1591 = vrot.lane.b32.xlu0 %v1280, 8
    %v1592 = vpop.permute.xlu0 %1591
    %1597 = vrot.lane.b32.xlu0 %v1356, 16
    %v1598 = vpop.permute.xlu0 %1597
    %1599 = vrot.lane.b32.xlu0 %v1432, 16
    %v1600 = vpop.permute.xlu0 %1599
    %1605 = vrot.lane.b32.xlu0 %v1508, 24
    %v1606 = vpop.permute.xlu0 %1605
    %1607 = vrot.lane.b32.xlu0 %v1584, 24
    %v1608 = vpop.permute.xlu0 %1607
    %v1611 = vsel %vm298, %v1052, %v1590
    %v1612 = vsel %vm298, %v1128, %v1592
    %vm1613 = vcmask 130048
    %v1614 = vsel %vm1613, %v1611, %v1598
    %v1615 = vsel %vm1613, %v1612, %v1600
    %vm1616 = vcmask 195584
    %v1617 = vsel %vm1616, %v1614, %v1606
    %v1618 = vsel %vm1616, %v1615, %v1608
    %v1619 = vld [vmem:[%s2] sm:$0xff]
    %v1620 = vld [vmem:[%s2 + $0x10] sm:$0xff]
    %v1621 = vld [vmem:[%s2 + $0x20] sm:$0xff]
    %v1622 = vld [vmem:[%s2 + $0x30] sm:$0xff]
    %v1623 = vld [vmem:[%s2 + $0x44] ss:$0 sm:$0xff]
    %1628 = vrot.lane.b32.xlu0 %v1619, 32
    %v1629 = vpop.permute.xlu0 %1628
    %1630 = vrot.lane.b32.xlu0 %v1620, 32
    %v1631 = vpop.permute.xlu0 %1630
    %1632 = vrot.lane.b32.xlu0 %v1621, 32
    %v1633 = vpop.permute.xlu0 %1632
    %1634 = vrot.lane.b32.xlu0 %v1622, 32
    %v1635 = vpop.permute.xlu0 %1634
    %v1641 = vsel %vm24, %v1617, 0
    %v1644 = vsel %vm24, %v1618, 0
    %1646 = vmatprep.subr.mxu0 0.0
    %1647 = vmatpush1.msra.mxu0 0.0
    %1648 = vmatprep.subr.mxu0 0.0
    %1649 = vmatpush1.msra.mxu0 0.0
    %1650 = vmatprep.subr.mxu0 0.0
    %1651 = vmatpush1.msra.mxu0 0.0
    %1652 = vmatprep.subr.mxu0 0.0
    %1653 = vmatpush1.msra.mxu0 0.0
    %1654 = vmatprep.subr.mxu0 0.0
    %1655 = vmatpush1.msra.mxu0 0.0
    %1656 = vmatprep.subr.mxu0 0.0
    %1657 = vmatpush1.msra.mxu0 0.0
    %1658 = vmatprep.subr.mxu0 0.0
    %1659 = vmatpush1.msra.mxu0 0.0
    %1660 = vmatprep.subr.mxu0 0.0
    %1661 = vmatpush1.msra.mxu0 0.0
    %1662 = vmatprep.subr.mxu0 0.0
    %1663 = vmatpush1.msra.mxu0 0.0
    %1664 = vmatprep.subr.mxu0 0.0
    %1665 = vmatpush1.msra.mxu0 0.0
    %1666 = vmatprep.subr.mxu0 0.0
    %1667 = vmatpush1.msra.mxu0 0.0
    %1668 = vmatprep.subr.mxu0 0.0
    %1669 = vmatpush1.msra.mxu0 0.0
    %1670 = vmatprep.subr.mxu0 0.0
    %1671 = vmatpush1.msra.mxu0 %v1635
    %1672 = vmatprep.subr.mxu0 0.0
    %1673 = vmatpush1.msra.mxu0 %v1633
    %1674 = vmatprep.subr.mxu0 0.0
    %1675 = vmatpush1.msra.mxu0 %v1631
    %1676 = vmatprep.subr.mxu0 0.0
    %1677 = vmatpush1.msra.mxu0 %v1629
    %1678 = vmatprep.subr.mxu0 0.0
    %1679 = vmatpush2.msra.mxu0 0.0
    %1680 = vmatprep.subr.mxu0 0.0
    %1681 = vmatpush2.msra.mxu0 0.0
    %1682 = vmatprep.subr.mxu0 0.0
    %1683 = vmatpush2.msra.mxu0 0.0
    %1684 = vmatprep.subr.mxu0 0.0
    %1685 = vmatpush2.msra.mxu0 0.0
    %1686 = vmatprep.subr.mxu0 0.0
    %1687 = vmatpush2.msra.mxu0 0.0
    %1688 = vmatprep.subr.mxu0 0.0
    %1689 = vmatpush2.msra.mxu0 0.0
    %1690 = vmatprep.subr.mxu0 0.0
    %1691 = vmatpush2.msra.mxu0 0.0
    %1692 = vmatprep.subr.mxu0 0.0
    %1693 = vmatpush2.msra.mxu0 0.0
    %1694 = vmatprep.subr.mxu0 0.0
    %1695 = vmatpush2.msra.mxu0 0.0
    %1696 = vmatprep.subr.mxu0 0.0
    %1697 = vmatpush2.msra.mxu0 0.0
    %1698 = vmatprep.subr.mxu0 0.0
    %1699 = vmatpush2.msra.mxu0 0.0
    %1700 = vmatprep.subr.mxu0 0.0
    %1701 = vmatpush2.msra.mxu0 0.0
    %1702 = vmatprep.subr.mxu0 0.0
    %1703 = vmatpush2.msra.mxu0 0.0
    %1704 = vmatprep.subr.mxu0 0.0
    %1705 = vmatpush2.msra.mxu0 0.0
    %1706 = vmatprep.subr.mxu0 0.0
    %1707 = vmatpush2.msra.mxu0 0.0
    %1708 = vmatprep.subr.mxu0 0.0
    %1709 = vmatpush2.msra.mxu0 0.0
    %1710 = vmatprep.mubr.f32.mxu0 0.0
    %1711 = vmatmul.mubr.f32.gmra.mxu0 %v1641
    %v1712 = vpop.f32.mrf.mxu0
    %v1713 = vadd.f32 0.0, %v1712
    %v1714 = vpop.f32.mrf.mxu0
    %1715 = vmatprep.mubr.f32.mxu0 0.0
    %1716 = vmatmul.mubr.f32.gmra.mxu0 %v1644
    %v1717 = vpop.f32.mrf.mxu0
    %v1718 = vadd.f32 0.0, %v1717
    %v1719 = vpop.f32.mrf.mxu0
    %1720 = vdwg.mxu0
    %v1721 = vadd.f32 %v18, %v1713
    %v1722 = vadd.f32 %v19, %v1718
    %v1723 = vadd.f32 %v1721, %v1623
    %v1724 = vadd.f32 %v1722, %v1623
    %v1725 = vld [vmem:[%s2 + $0x45] ss:$0 sm:$0xff]
    %v1726 = vld [vmem:[%s2 + $0x46] ss:$0 sm:$0xff]
    %v1727 = vsel %vm24, %v1723, 0.0
    %1728 = vadd.xlane.f32.xlu0 %v1727
    %v1729 = vpop.xlane.xlu0 %1728
    %v1730 = vsel %vm24, %v1724, 0.0
    %1731 = vadd.xlane.f32.xlu0 %v1730
    %v1732 = vpop.xlane.xlu0 %1731
    %v1733 = vmul.f32 %v1729, %v37
    %v1734 = vmul.f32 %v1732, %v37
    %v1735 = vsub.f32 %v1723, %v1733
    %v1736 = vsub.f32 %v1724, %v1734
    %v1737 = vmul.f32 %v1735, %v1735
    %v1738 = vmul.f32 %v1736, %v1736
    %v1739 = vsel %vm24, %v1737, 0.0
    %1740 = vadd.xlane.f32.xlu0 %v1739
    %v1741 = vpop.xlane.xlu0 %1740
    %v1742 = vsel %vm24, %v1738, 0.0
    %1743 = vadd.xlane.f32.xlu0 %v1742
    %v1744 = vpop.xlane.xlu0 %1743
    %v1745 = vmul.f32 %v1741, %v37
    %v1746 = vmul.f32 %v1744, %v37
    %v1747 = vadd.f32 %v1745, 1e-05
    %v1748 = vadd.f32 %v1746, 1e-05
    %v1749 = vrsqrt.pop %v1747
    %v1750 = vrsqrt.pop %v1748
    %v1751 = vmul.f32 %v1735, %v1749
    %v1752 = vmul.f32 %v1736, %v1750
    %v1753 = vmul.f32 %v1751, %v1725
    %v1754 = vmul.f32 %v1752, %v1725
    %v1755 = vadd.f32 %v1753, %v1726
    %v1756 = vadd.f32 %v1754, %v1726
    %v1757 = vld [vmem:[%s2 + $0x8] sm:$0xff]
    %v1758 = vld [vmem:[%s2 + $0x18] sm:$0xff]
    %v1759 = vld [vmem:[%s2 + $0x28] sm:$0xff]
    %v1760 = vld [vmem:[%s2 + $0x38] sm:$0xff]
    %v1761 = vld [vmem:[%s2 + $0x47] ss:$0 sm:$0xff]
    %v1763 = vsel %vm24, %v1755, 0
    %v1766 = vsel %vm24, %v1756, 0
    %1768 = vmatprep.subr.mxu0 0.0
    %1769 = vmatpush1.msra.mxu0 0.0
    %1770 = vmatprep.subr.mxu0 0.0
    %1771 = vmatpush1.msra.mxu0 0.0
    %1772 = vmatprep.subr.mxu0 0.0
    %1773 = vmatpush1.msra.mxu0 0.0
    %1774 = vmatprep.subr.mxu0 0.0
    %1775 = vmatpush1.msra.mxu0 0.0
    %1776 = vmatprep.subr.mxu0 0.0
    %1777 = vmatpush1.msra.mxu0 0.0
    %1778 = vmatprep.subr.mxu0 0.0
    %1779 = vmatpush1.msra.mxu0 0.0
    %1780 = vmatprep.subr.mxu0 0.0
    %1781 = vmatpush1.msra.mxu0 0.0
    %1782 = vmatprep.subr.mxu0 0.0
    %1783 = vmatpush1.msra.mxu0 0.0
    %1784 = vmatprep.subr.mxu0 0.0
    %1785 = vmatpush1.msra.mxu0 0.0
    %1786 = vmatprep.subr.mxu0 0.0
    %1787 = vmatpush1.msra.mxu0 0.0
    %1788 = vmatprep.subr.mxu0 0.0
    %1789 = vmatpush1.msra.mxu0 0.0
    %1790 = vmatprep.subr.mxu0 0.0
    %1791 = vmatpush1.msra.mxu0 0.0
    %1792 = vmatprep.subr.mxu0 0.0
    %1793 = vmatpush1.msra.mxu0 %v1760
    %1794 = vmatprep.subr.mxu0 0.0
    %1795 = vmatpush1.msra.mxu0 %v1759
    %1796 = vmatprep.subr.mxu0 0.0
    %1797 = vmatpush1.msra.mxu0 %v1758
    %1798 = vmatprep.subr.mxu0 0.0
    %1799 = vmatpush1.msra.mxu0 %v1757
    %1800 = vmatprep.subr.mxu0 0.0
    %1801 = vmatpush2.msra.mxu0 0.0
    %1802 = vmatprep.subr.mxu0 0.0
    %1803 = vmatpush2.msra.mxu0 0.0
    %1804 = vmatprep.subr.mxu0 0.0
    %1805 = vmatpush2.msra.mxu0 0.0
    %1806 = vmatprep.subr.mxu0 0.0
    %1807 = vmatpush2.msra.mxu0 0.0
    %1808 = vmatprep.subr.mxu0 0.0
    %1809 = vmatpush2.msra.mxu0 0.0
    %1810 = vmatprep.subr.mxu0 0.0
    %1811 = vmatpush2.msra.mxu0 0.0
    %1812 = vmatprep.subr.mxu0 0.0
    %1813 = vmatpush2.msra.mxu0 0.0
    %1814 = vmatprep.subr.mxu0 0.0
    %1815 = vmatpush2.msra.mxu0 0.0
    %1816 = vmatprep.subr.mxu0 0.0
    %1817 = vmatpush2.msra.mxu0 0.0
    %1818 = vmatprep.subr.mxu0 0.0
    %1819 = vmatpush2.msra.mxu0 0.0
    %1820 = vmatprep.subr.mxu0 0.0
    %1821 = vmatpush2.msra.mxu0 0.0
    %1822 = vmatprep.subr.mxu0 0.0
    %1823 = vmatpush2.msra.mxu0 0.0
    %1824 = vmatprep.subr.mxu0 0.0
    %1825 = vmatpush2.msra.mxu0 0.0
    %1826 = vmatprep.subr.mxu0 0.0
    %1827 = vmatpush2.msra.mxu0 0.0
    %1828 = vmatprep.subr.mxu0 0.0
    %1829 = vmatpush2.msra.mxu0 0.0
    %1830 = vmatprep.subr.mxu0 0.0
    %1831 = vmatpush2.msra.mxu0 0.0
    %1832 = vmatprep.mubr.f32.mxu0 0.0
    %1833 = vmatmul.mubr.f32.gmra.mxu0 %v1763
    %v1834 = vpop.f32.mrf.mxu0
    %v1835 = vadd.f32 %v1761, %v1834
    %v1836 = vpop.f32.mrf.mxu0
    %1837 = vmatprep.mubr.f32.mxu0 0.0
    %1838 = vmatmul.mubr.f32.gmra.mxu0 %v1766
    %v1839 = vpop.f32.mrf.mxu0
    %v1840 = vadd.f32 %v1761, %v1839
    %v1841 = vpop.f32.mrf.mxu0
    %1842 = vdwg.mxu0
    %v1843 = vmul.f32 %v1835, 0.5
    %v1844 = vmul.f32 %v1840, 0.5
    %v1845 = vmul.f32 %v1835, 0.70710677
    %v1846 = vmul.f32 %v1840, 0.70710677
    %v1847 = vand.u32 2147483647, %v1845
    %v1848 = vand.u32 2147483647, %v1846
    %v1849 = vmul.f32 %v1847, 0.3275911
    %v1850 = vmul.f32 %v1848, 0.3275911
    %v1851 = vadd.f32 %v1849, 1.0
    %v1852 = vadd.f32 %v1850, 1.0
    %v1853 = vrcp.pop %v1851
    %v1854 = vmul.f32 1.0, %v1853
    %v1855 = vrcp.pop %v1852
    %v1856 = vmul.f32 1.0, %v1855
    %v1857 = vmul.f32 %v1854, 1.0614054
    %v1858 = vmul.f32 %v1856, 1.0614054
    %v1859 = vadd.f32 %v1857, -1.4531521
    %v1860 = vadd.f32 %v1858, -1.4531521
    %v1861 = vmul.f32 %v1859, %v1854
    %v1862 = vmul.f32 %v1860, %v1856
    %v1863 = vadd.f32 %v1861, 1.4214138
    %v1864 = vadd.f32 %v1862, 1.4214138
    %v1865 = vmul.f32 %v1863, %v1854
    %v1866 = vmul.f32 %v1864, %v1856
    %v1867 = vadd.f32 %v1865, -0.28449672
    %v1868 = vadd.f32 %v1866, -0.28449672
    %v1869 = vmul.f32 %v1867, %v1854
    %v1870 = vmul.f32 %v1868, %v1856
    %v1871 = vadd.f32 %v1869, 0.2548296
    %v1872 = vadd.f32 %v1870, 0.2548296
    %v1873 = vmul.f32 %v1871, %v1854
    %v1874 = vmul.f32 %v1872, %v1856
    %v1875 = vsub.f32 0.0, %v1847
    %v1876 = vsub.f32 0.0, %v1848
    %v1877 = vmul.f32 %v1875, %v1847
    %v1878 = vmul.f32 %v1876, %v1848
    %v1879 = vmul.f32 %v1877, 1.442695
    %v1880 = vpow.pop %v1879
    %v1881 = vmul.f32 %v1878, 1.442695
    %v1882 = vpow.pop %v1881
    %v1883 = vmul.f32 %v1873, %v1880
    %v1884 = vmul.f32 %v1874, %v1882
    %v1885 = vsub.f32 1.0, %v1883
    %v1886 = vsub.f32 1.0, %v1884
    %vm1887 = vcmp.lt.f32.partialorder %v1845, 0.0
    %vm1888 = vcmp.lt.f32.partialorder %v1846, 0.0
    %v1889 = vsub.f32 0.0, %v1885
    %v1890 = vsub.f32 0.0, %v1886
    %v1891 = vsel %vm1887, %v1889, %v1885
    %v1892 = vsel %vm1888, %v1890, %v1886
    %v1893 = vadd.f32 %v1891, 1.0
    %v1894 = vadd.f32 %v1892, 1.0
    %v1895 = vmul.f32 %v1843, %v1893
    %v1896 = vmul.f32 %v1844, %v1894
    %v1897 = vld [vmem:[%s2 + $0x50] ss:$0 sm:$0xff]
    %v1898 = vld [vmem:[%s3] sm:$0xff]
    %v1899 = vld [vmem:[%s3 + $0x8] sm:$0xff]
    %v1900 = vld [vmem:[%s3 + $0x10] sm:$0xff]
    %v1901 = vld [vmem:[%s3 + $0x18] sm:$0xff]
    %v1902 = vld [vmem:[%s3 + $0x20] sm:$0xff]
    %v1903 = vld [vmem:[%s3 + $0x28] sm:$0xff]
    %v1904 = vld [vmem:[%s3 + $0x30] sm:$0xff]
    %v1905 = vld [vmem:[%s3 + $0x38] sm:$0xff]
    %v1906 = vld [vmem:[%s3 + $0x40] sm:$0xff]
    %v1907 = vld [vmem:[%s3 + $0x48] sm:$0xff]
    %v1908 = vld [vmem:[%s3 + $0x50] sm:$0xff]
    %v1909 = vld [vmem:[%s3 + $0x58] sm:$0xff]
    %v1910 = vld [vmem:[%s3 + $0x60] sm:$0xff]
    %v1911 = vld [vmem:[%s3 + $0x68] sm:$0xff]
    %v1912 = vld [vmem:[%s3 + $0x70] sm:$0xff]
    %v1913 = vld [vmem:[%s3 + $0x78] sm:$0xff]
    %1914 = vmatprep.subr.mxu0 0.0
    %1915 = vmatpush1.msra.mxu0 %v1913
    %1916 = vmatprep.subr.mxu0 0.0
    %1917 = vmatpush1.msra.mxu0 %v1912
    %1918 = vmatprep.subr.mxu0 0.0
    %1919 = vmatpush1.msra.mxu0 %v1911
    %1920 = vmatprep.subr.mxu0 0.0
    %1921 = vmatpush1.msra.mxu0 %v1910
    %1922 = vmatprep.subr.mxu0 0.0
    %1923 = vmatpush1.msra.mxu0 %v1909
    %1924 = vmatprep.subr.mxu0 0.0
    %1925 = vmatpush1.msra.mxu0 %v1908
    %1926 = vmatprep.subr.mxu0 0.0
    %1927 = vmatpush1.msra.mxu0 %v1907
    %1928 = vmatprep.subr.mxu0 0.0
    %1929 = vmatpush1.msra.mxu0 %v1906
    %1930 = vmatprep.subr.mxu0 0.0
    %1931 = vmatpush1.msra.mxu0 %v1905
    %1932 = vmatprep.subr.mxu0 0.0
    %1933 = vmatpush1.msra.mxu0 %v1904
    %1934 = vmatprep.subr.mxu0 0.0
    %1935 = vmatpush1.msra.mxu0 %v1903
    %1936 = vmatprep.subr.mxu0 0.0
    %1937 = vmatpush1.msra.mxu0 %v1902
    %1938 = vmatprep.subr.mxu0 0.0
    %1939 = vmatpush1.msra.mxu0 %v1901
    %1940 = vmatprep.subr.mxu0 0.0
    %1941 = vmatpush1.msra.mxu0 %v1900
    %1942 = vmatprep.subr.mxu0 0.0
    %1943 = vmatpush1.msra.mxu0 %v1899
    %1944 = vmatprep.subr.mxu0 0.0
    %1945 = vmatpush1.msra.mxu0 %v1898
    %1946 = vmatprep.subr.mxu0 0.0
    %1947 = vmatpush2.msra.mxu0 0.0
    %1948 = vmatprep.subr.mxu0 0.0
    %1949 = vmatpush2.msra.mxu0 0.0
    %1950 = vmatprep.subr.mxu0 0.0
    %1951 = vmatpush2.msra.mxu0 0.0
    %1952 = vmatprep.subr.mxu0 0.0
    %1953 = vmatpush2.msra.mxu0 0.0
    %1954 = vmatprep.subr.mxu0 0.0
    %1955 = vmatpush2.msra.mxu0 0.0
    %1956 = vmatprep.subr.mxu0 0.0
    %1957 = vmatpush2.msra.mxu0 0.0
    %1958 = vmatprep.subr.mxu0 0.0
    %1959 = vmatpush2.msra.mxu0 0.0
    %1960 = vmatprep.subr.mxu0 0.0
    %1961 = vmatpush2.msra.mxu0 0.0
    %1962 = vmatprep.subr.mxu0 0.0
    %1963 = vmatpush2.msra.mxu0 0.0
    %1964 = vmatprep.subr.mxu0 0.0
    %1965 = vmatpush2.msra.mxu0 0.0
    %1966 = vmatprep.subr.mxu0 0.0
    %1967 = vmatpush2.msra.mxu0 0.0
    %1968 = vmatprep.subr.mxu0 0.0
    %1969 = vmatpush2.msra.mxu0 0.0
    %1970 = vmatprep.subr.mxu0 0.0
    %1971 = vmatpush2.msra.mxu0 0.0
    %1972 = vmatprep.subr.mxu0 0.0
    %1973 = vmatpush2.msra.mxu0 0.0
    %1974 = vmatprep.subr.mxu0 0.0
    %1975 = vmatpush2.msra.mxu0 0.0
    %1976 = vmatprep.subr.mxu0 0.0
    %1977 = vmatpush2.msra.mxu0 0.0
    %1978 = vmatprep.mubr.f32.mxu0 0.0
    %1979 = vmatmul.mubr.f32.gmra.mxu0 %v1895
    %v1980 = vpop.f32.mrf.mxu0
    %v1981 = vadd.f32 %v1897, %v1980
    %v1982 = vpop.f32.mrf.mxu0
    %1983 = vmatprep.mubr.f32.mxu0 0.0
    %1984 = vmatmul.mubr.f32.gmra.mxu0 %v1896
    %v1985 = vpop.f32.mrf.mxu0
    %v1986 = vadd.f32 %v1897, %v1985
    %v1987 = vpop.f32.mrf.mxu0
    %1988 = vdwg.mxu0
    %v1989 = vadd.f32 %v1723, %v1981
    %v1990 = vadd.f32 %v1724, %v1986
    %1991 = vst.msk [vmem:[#allocation2] sm:$0xff] %vm24, %v1989
    %1992 = vst.msk [vmem:[#allocation2 + $0x8] sm:$0xff] %vm24, %v1990
    // Predicated region
    $region18: #{cross_block.1} parent=1 // pred_check
      _
    $region19: #{cross_block.1} parent=1 // pred_check_branch
      %1994 = sbr.rel (0) target = $region21
    $region20: #{cross_block.1} parent=1 // pred_region
      %s1996 = ssub.s32 256, 256
      %1997 = vsyncadd [#allocation3], %s1996
      %s1998 = sshll.u32 [#allocation2], 4
      %s1999 = int_to_ptr.vmem [resolvable:$true] %s1998
      %2004 = dma.vmem_to_hbm [thread:$0]  %s1999, 256, %s4, [#allocation3], 128, 128, 8
    $region21: #{cross_block.1} parent=1 // pred_fallthru
      _
    // Predicated region
    $region22: #{cross_block.1} parent=1 // pred_check
      _
    $region23: #{cross_block.1} parent=1 // pred_check_branch
      %2006 = sbr.rel (0) target = $region25
    $region24: #{cross_block.1} parent=1 // pred_region
      %2007 = dma.done [#allocation3], 256
    $region25: #{cross_block.1} parent=1 // pred_fallthru
      _
    %2008 = vsyncpa [#allocation3], 1

</llo_original>
